<compile_context>
chip_gen: v7x
topology: tpu7x:2x2x1
jax: 0.10.0
libtpu: 0.0.40
codegen_flags: <defaults>
</compile_context>

<pallas_src>
import functools

import numpy as np

import jax
import jax.numpy as jnp
from jax import lax
from jax.experimental import pallas as pl
from jax.experimental.pallas import tpu as pltpu


def downg_kernel(xs_ref, w1_ref, b1_ref, w2_ref, b2_ref, mask_ref, o_ref, hs_ref,
                 *, K, Wpad, mean, scale):
    """Single fused step over the whole (tiny) batch.

    xs_ref  : (K*K*Cin, Lh)    f32  im2col slab of the pooled/padded/flattened input
    w1_ref  : (Cout, K*K*Cin)  f32  conv1 weights, taps folded into the contraction dim
    b1_ref  : (Cout, 1)        f32
    w2_ref  : (Cout, K*K*Cout) f32  conv2 weights, taps folded into the contraction dim
    b2_ref  : (Cout, 1)        f32
    mask_ref: (1, Lh)          f32  trace-time validity mask (halo / wrap / guard lanes)
    o_ref   : (Cout, Mout)     f32  flat conv2 output, lane-dense (128-multiple width)
    hs_ref  : (K*K*Cout, Mout) f32  VMEM scratch holding conv2's shifted-slice slab
    """
    Cout, Mout = o_ref.shape

    # ---- conv1: one MXU dot over the folded K*K*Cin contraction, bias + ReLU + norm ----
    h = jnp.dot(w1_ref[...], xs_ref[...], preferred_element_type=jnp.float32,
                precision=lax.Precision.HIGHEST)
    h = jnp.maximum(h + b1_ref[...], 0.0)
    if mean != 0.0:                              # trace-time branch (CustomBatchNorm shift)
        h = h - mean
    h = h * scale                                # CustomBatchNorm: * 1/(std + 1e-5)
    h = h * mask_ref[...]                        # zero halo / wrap-around / guard-row lanes

    # ---- conv2: stack the K*K shifted lane-slices into an aligned scratch slab, then one
    #      MXU dot over the folded K*K*Cout contraction ----
    offs = [kh * Wpad + kw for kh in range(K) for kw in range(K)]
    for t, off in enumerate(offs):
        hs_ref[t * Cout:(t + 1) * Cout, :] = h[:, off:off + Mout]

    out = jnp.dot(w2_ref[...], hs_ref[...], preferred_element_type=jnp.float32,
                  precision=lax.Precision.HIGHEST)
    out = jnp.maximum(out + b2_ref[...], 0.0)
    if mean != 0.0:
        out = out - mean
    o_ref[...] = out * scale                     # lane-dense, unmasked vector store


def _round_up(x, m):
    return (x + m - 1) // m * m


def downg_forward(x_nchw, w1, b1, w2, b2, *, K=3, P=1, mean=0.0, std=1.0):
    N, Cin, H, W = x_nchw.shape
    Cout = w1.shape[0]
    Hp, Wp = H // 2, W // 2
    Wpad, Hpad = Wp + 2 * P, Hp + 2 * P
    Lpad = (Hpad + 1) * Wpad                     # per-image flat length (+1 guard row)
    Lout = Hp * Wpad                             # per-image flat output span
    ext = (K - 1) * (Wpad + 1)                   # largest KxK tap offset
    lead = P * Wpad + P                          # left halo so tap slices never go negative
    Mout = _round_up((N - 1) * Lpad + Lout, 128)  # lane-dense output width
    Lh = Mout + ext                              # conv1 activation slab width
    Lin = Lh + ext                               # input slab width
    assert Lin >= lead + N * Lpad, "input slab too narrow for the folded batch"

    offs = [kh * Wpad + kw for kh in range(K) for kw in range(K)]

    # ---- glue (tiny, memory-bound): 2x2 maxpool + pad/flatten/im2col layout plumbing ----
    xp = x_nchw.reshape(N, Cin, Hp, 2, Wp, 2).max(axis=(3, 5))            # (N,Cin,Hp,Wp)
    xpad = jnp.pad(xp, ((0, 0), (0, 0), (P, P + 1), (P, P)))              # (N,Cin,Hpad+1,Wpad)
    x_flat = jnp.transpose(xpad, (1, 0, 2, 3)).reshape(Cin, N * Lpad)
    x_flat = jnp.pad(x_flat, ((0, 0), (lead, Lin - lead - N * Lpad)))     # (Cin, Lin)
    xs = jnp.concatenate([x_flat[:, o:o + Lh] for o in offs], axis=0)     # (K*K*Cin, Lh)

    # torch conv weights (Cout, Cin, KH, KW) -> (Cout, KH*KW*Cin): taps folded into the
    # contraction dim, row order tap-major / channel-minor to match xs / the scratch slab.
    w1m = jnp.transpose(w1, (0, 2, 3, 1)).reshape(Cout, K * K * Cin).astype(jnp.float32)
    w2m = jnp.transpose(w2, (0, 2, 3, 1)).reshape(Cout, K * K * Cout).astype(jnp.float32)
    b1m = b1.reshape(Cout, 1).astype(jnp.float32)
    b2m = b2.reshape(Cout, 1).astype(jnp.float32)

    # Trace-time validity mask over conv1 activation lanes: lane q holds the conv1 output
    # for flat index f = q - lead = n*Lpad + i*Wpad + j; keep only 0 <= f < N*Lpad,
    # j < Wp (no wrap-around) and i < Hp (no bottom-pad / guard row).
    q = np.arange(Lh)
    f = q - lead
    valid = (f >= 0) & (f < N * Lpad) & (f % Wpad < Wp) & (f % Lpad < Lout)
    mask = jnp.asarray(valid.astype(np.float32).reshape(1, Lh))

    kernel = functools.partial(downg_kernel, K=K, Wpad=Wpad,
                               mean=float(mean), scale=1.0 / (float(std) + 1e-5))

    out_flat = pl.pallas_call(
        kernel,
        out_shape=jax.ShapeDtypeStruct((Cout, Mout), jnp.float32),
        in_specs=[pl.BlockSpec(memory_space=pltpu.MemorySpace.VMEM)] * 6,
        out_specs=pl.BlockSpec(memory_space=pltpu.MemorySpace.VMEM),
        scratch_shapes=[pltpu.VMEM((K * K * Cout, Mout), jnp.float32)],
    )(xs, w1m, b1m, w2m, b2m, mask)

    # ---- glue: single reshape / crop / transpose epilogue -> NCHW ----
    out = out_flat[:, :N * Lpad].reshape(Cout, N, Hpad + 1, Wpad)[:, :, :Hp, :Wp]
    return jnp.transpose(out, (1, 0, 2, 3))                              # (N,Cout,Hp,Wp)


def ref_forward(x, w1, b1, w2, b2, *, mean, std):
    """Pure-JAX reference mirroring the PyTorch forward (NCHW, full f32)."""
    N, C, H, W = x.shape
    xp = x.reshape(N, C, H // 2, 2, W // 2, 2).max(axis=(3, 5))

    def conv(h, w, b):
        o = lax.conv_general_dilated(h, w, (1, 1), ((1, 1), (1, 1)),
                                     dimension_numbers=("NCHW", "OIHW", "NCHW"),
                                     precision=lax.Precision.HIGHEST)
        return o + b[None, :, None, None]

    h = jnp.maximum(conv(xp, w1, b1), 0.0)
    h = (h - mean) / (std + 1e-5)
    h = jnp.maximum(conv(h, w2, b2), 0.0)
    h = (h - mean) / (std + 1e-5)
    return h


if __name__ == "__main__":
    N, Cin, H, W = 2, 4, 16, 16
    Cout, K, P = 8, 3, 1
    mean, std = 0.0, 1.0

    key = jax.random.PRNGKey(0)
    k1, k2, k3, k4, k5 = jax.random.split(key, 5)
    x = jax.random.normal(k1, (N, Cin, H, W), jnp.float32)
    w1 = 0.1 * jax.random.normal(k2, (Cout, Cin, K, K), jnp.float32)
    b1 = 0.1 * jax.random.normal(k3, (Cout,), jnp.float32)
    w2 = 0.1 * jax.random.normal(k4, (Cout, Cout, K, K), jnp.float32)
    b2 = 0.1 * jax.random.normal(k5, (Cout,), jnp.float32)

    fwd = jax.jit(functools.partial(downg_forward, K=K, P=P, mean=mean, std=std))
    out = jax.block_until_ready(fwd(x, w1, b1, w2, b2))

    assert out.shape == (N, Cout, H // 2, W // 2), out.shape

    ref = ref_forward(x, w1, b1, w2, b2, mean=mean, std=std)
    err = float(jnp.max(jnp.abs(out - ref)))
    # f32 operands with HIGHEST-precision MXU dots: only summation-order noise remains.
    assert err < 1e-3, f"max abs error vs reference: {err}"

    print("KERNEL_OK")
</pallas_src>

<mosaic_0001>
module attributes {stable_mosaic.version = 11 : i64} {
  func.func @downg_kernel(%arg0: memref<36x278xf32, #tpu.memory_space<vmem>>, %arg1: memref<8x36xf32, #tpu.memory_space<vmem>>, %arg2: memref<8x1xf32, #tpu.memory_space<vmem>>, %arg3: memref<8x72xf32, #tpu.memory_space<vmem>>, %arg4: memref<8x1xf32, #tpu.memory_space<vmem>>, %arg5: memref<1x278xf32, #tpu.memory_space<vmem>>, %arg6: memref<8x256xf32, #tpu.memory_space<vmem>>, %arg7: memref<72x256xf32, #tpu.memory_space<vmem>>) attributes {dimension_semantics = [], scalar_prefetch = 0 : i64, scratch_operands = 1 : i64, tpu.core_type = #tpu.core_type<tc>} {
    %c0 = arith.constant 0 : index
    %c0_0 = arith.constant 0 : index
    %0 = vector.load %arg1[%c0, %c0_0] : memref<8x36xf32, #tpu.memory_space<vmem>>, vector<8x36xf32>
    %c0_1 = arith.constant 0 : index
    %c0_2 = arith.constant 0 : index
    %1 = vector.load %arg0[%c0_1, %c0_2] : memref<36x278xf32, #tpu.memory_space<vmem>>, vector<36x278xf32>
    %cst = arith.constant dense<0.000000e+00> : vector<8x278xf32>
    %2 = tpu.matmul %0, %1, %cst {dimension_numbers = #tpu.dot_dimension_numbers<[1], [0], [0], [1], [0, 0, 1, 1], [], []>, precision = #tpu.contract_precision<fp32>} : vector<8x36xf32>, vector<36x278xf32>, vector<8x278xf32> -> vector<8x278xf32>
    %c0_3 = arith.constant 0 : index
    %c0_4 = arith.constant 0 : index
    %3 = vector.load %arg2[%c0_3, %c0_4] : memref<8x1xf32, #tpu.memory_space<vmem>>, vector<8x1xf32>
    %4 = vector.broadcast %3 : vector<8x1xf32> to vector<8x278xf32>
    %5 = arith.addf %2, %4 : vector<8x278xf32>
    %cst_5 = arith.constant 0.000000e+00 : f32
    %6 = vector.broadcast %cst_5 : f32 to vector<8x278xf32>
    %7 = arith.maximumf %5, %6 : vector<8x278xf32>
    %cst_6 = arith.constant 0.999989986 : f32
    %8 = vector.broadcast %cst_6 : f32 to vector<8x278xf32>
    %9 = arith.mulf %7, %8 : vector<8x278xf32>
    %c0_7 = arith.constant 0 : index
    %c0_8 = arith.constant 0 : index
    %10 = vector.load %arg5[%c0_7, %c0_8] : memref<1x278xf32, #tpu.memory_space<vmem>>, vector<1x278xf32>
    %11 = vector.broadcast %10 : vector<1x278xf32> to vector<8x278xf32>
    %12 = arith.mulf %9, %11 : vector<8x278xf32>
    %13 = vector.extract_strided_slice %12 {offsets = [0, 0], sizes = [8, 256], strides = [1, 1]} : vector<8x278xf32> to vector<8x256xf32>
    %c0_9 = arith.constant 0 : index
    %c0_10 = arith.constant 0 : index
    %14 = vector.load %arg7[%c0_9, %c0_10] : memref<72x256xf32, #tpu.memory_space<vmem>>, vector<8x256xf32>
    tpu.vector_store %arg7[%c0_9, %c0_10], %13 {strides = array<i32>} : memref<72x256xf32, #tpu.memory_space<vmem>>, vector<8x256xf32>,
    %15 = vector.extract_strided_slice %12 {offsets = [0, 1], sizes = [8, 256], strides = [1, 1]} : vector<8x278xf32> to vector<8x256xf32>
    %c8 = arith.constant 8 : index
    %c0_11 = arith.constant 0 : index
    %16 = vector.load %arg7[%c8, %c0_11] : memref<72x256xf32, #tpu.memory_space<vmem>>, vector<8x256xf32>
    tpu.vector_store %arg7[%c8, %c0_11], %15 {strides = array<i32>} : memref<72x256xf32, #tpu.memory_space<vmem>>, vector<8x256xf32>,
    %17 = vector.extract_strided_slice %12 {offsets = [0, 2], sizes = [8, 256], strides = [1, 1]} : vector<8x278xf32> to vector<8x256xf32>
    %c16 = arith.constant 16 : index
    %c0_12 = arith.constant 0 : index
    %18 = vector.load %arg7[%c16, %c0_12] : memref<72x256xf32, #tpu.memory_space<vmem>>, vector<8x256xf32>
    tpu.vector_store %arg7[%c16, %c0_12], %17 {strides = array<i32>} : memref<72x256xf32, #tpu.memory_space<vmem>>, vector<8x256xf32>,
    %19 = vector.extract_strided_slice %12 {offsets = [0, 10], sizes = [8, 256], strides = [1, 1]} : vector<8x278xf32> to vector<8x256xf32>
    %c24 = arith.constant 24 : index
    %c0_13 = arith.constant 0 : index
    %20 = vector.load %arg7[%c24, %c0_13] : memref<72x256xf32, #tpu.memory_space<vmem>>, vector<8x256xf32>
    tpu.vector_store %arg7[%c24, %c0_13], %19 {strides = array<i32>} : memref<72x256xf32, #tpu.memory_space<vmem>>, vector<8x256xf32>,
    %21 = vector.extract_strided_slice %12 {offsets = [0, 11], sizes = [8, 256], strides = [1, 1]} : vector<8x278xf32> to vector<8x256xf32>
    %c32 = arith.constant 32 : index
    %c0_14 = arith.constant 0 : index
    %22 = vector.load %arg7[%c32, %c0_14] : memref<72x256xf32, #tpu.memory_space<vmem>>, vector<8x256xf32>
    tpu.vector_store %arg7[%c32, %c0_14], %21 {strides = array<i32>} : memref<72x256xf32, #tpu.memory_space<vmem>>, vector<8x256xf32>,
    %23 = vector.extract_strided_slice %12 {offsets = [0, 12], sizes = [8, 256], strides = [1, 1]} : vector<8x278xf32> to vector<8x256xf32>
    %c40 = arith.constant 40 : index
    %c0_15 = arith.constant 0 : index
    %24 = vector.load %arg7[%c40, %c0_15] : memref<72x256xf32, #tpu.memory_space<vmem>>, vector<8x256xf32>
    tpu.vector_store %arg7[%c40, %c0_15], %23 {strides = array<i32>} : memref<72x256xf32, #tpu.memory_space<vmem>>, vector<8x256xf32>,
    %25 = vector.extract_strided_slice %12 {offsets = [0, 20], sizes = [8, 256], strides = [1, 1]} : vector<8x278xf32> to vector<8x256xf32>
    %c48 = arith.constant 48 : index
    %c0_16 = arith.constant 0 : index
    %26 = vector.load %arg7[%c48, %c0_16] : memref<72x256xf32, #tpu.memory_space<vmem>>, vector<8x256xf32>
    tpu.vector_store %arg7[%c48, %c0_16], %25 {strides = array<i32>} : memref<72x256xf32, #tpu.memory_space<vmem>>, vector<8x256xf32>,
    %27 = vector.extract_strided_slice %12 {offsets = [0, 21], sizes = [8, 256], strides = [1, 1]} : vector<8x278xf32> to vector<8x256xf32>
    %c56 = arith.constant 56 : index
    %c0_17 = arith.constant 0 : index
    %28 = vector.load %arg7[%c56, %c0_17] : memref<72x256xf32, #tpu.memory_space<vmem>>, vector<8x256xf32>
    tpu.vector_store %arg7[%c56, %c0_17], %27 {strides = array<i32>} : memref<72x256xf32, #tpu.memory_space<vmem>>, vector<8x256xf32>,
    %29 = vector.extract_strided_slice %12 {offsets = [0, 22], sizes = [8, 256], strides = [1, 1]} : vector<8x278xf32> to vector<8x256xf32>
    %c64 = arith.constant 64 : index
    %c0_18 = arith.constant 0 : index
    %30 = vector.load %arg7[%c64, %c0_18] : memref<72x256xf32, #tpu.memory_space<vmem>>, vector<8x256xf32>
    tpu.vector_store %arg7[%c64, %c0_18], %29 {strides = array<i32>} : memref<72x256xf32, #tpu.memory_space<vmem>>, vector<8x256xf32>,
    %c0_19 = arith.constant 0 : index
    %c0_20 = arith.constant 0 : index
    %31 = vector.load %arg3[%c0_19, %c0_20] : memref<8x72xf32, #tpu.memory_space<vmem>>, vector<8x72xf32>
    %c0_21 = arith.constant 0 : index
    %c0_22 = arith.constant 0 : index
    %32 = vector.load %arg7[%c0_21, %c0_22] : memref<72x256xf32, #tpu.memory_space<vmem>>, vector<72x256xf32>
    %cst_23 = arith.constant dense<0.000000e+00> : vector<8x256xf32>
    %33 = tpu.matmul %31, %32, %cst_23 {dimension_numbers = #tpu.dot_dimension_numbers<[1], [0], [0], [1], [0, 0, 1, 1], [], []>, precision = #tpu.contract_precision<fp32>} : vector<8x72xf32>, vector<72x256xf32>, vector<8x256xf32> -> vector<8x256xf32>
    %c0_24 = arith.constant 0 : index
    %c0_25 = arith.constant 0 : index
    %34 = vector.load %arg4[%c0_24, %c0_25] : memref<8x1xf32, #tpu.memory_space<vmem>>, vector<8x1xf32>
    %35 = vector.broadcast %34 : vector<8x1xf32> to vector<8x256xf32>
    %36 = arith.addf %33, %35 : vector<8x256xf32>
    %cst_26 = arith.constant 0.000000e+00 : f32
    %37 = vector.broadcast %cst_26 : f32 to vector<8x256xf32>
    %38 = arith.maximumf %36, %37 : vector<8x256xf32>
    %cst_27 = arith.constant 0.999989986 : f32
    %39 = vector.broadcast %cst_27 : f32 to vector<8x256xf32>
    %40 = arith.mulf %38, %39 : vector<8x256xf32>
    %c0_28 = arith.constant 0 : index
    %c0_29 = arith.constant 0 : index
    %41 = vector.load %arg6[%c0_28, %c0_29] : memref<8x256xf32, #tpu.memory_space<vmem>>, vector<8x256xf32>
    tpu.vector_store %arg6[%c0_28, %c0_29], %40 {strides = array<i32>} : memref<8x256xf32, #tpu.memory_space<vmem>>, vector<8x256xf32>,
    return
  }
}

</mosaic_0001>

<llo_original>
// kernel: downg_forward.1
$region0: #{downg_forward.1}
  #allocation0 [shape = 'u32[]', space=smem, size = 0x4, offset = 0x4, fixed_abs, tag = 'smem constant byte address 0x4 - core index']
  #allocation1 [shape = 'u32[144,128]{1,0:T(1,128)}', space=vmem, size = 0x12000, scoped, tag = 'internal scratch']
  #allocation2 [shape = 'f32[72,256]{1,0:T(8,128)}', space=vmem, size = 0x12000, scoped, tag = 'scratch operand']
  %s0 = inlined_call_operand.vmem [shape: f32[36,278], index: 0, kind: input, shape index: {}]
  %s1 = inlined_call_operand.vmem [shape: f32[8,36], index: 1, kind: input, shape index: {}]
  %s2 = inlined_call_operand.vmem [shape: f32[8,1], index: 2, kind: input, shape index: {}]
  %s3 = inlined_call_operand.vmem [shape: f32[8,72], index: 3, kind: input, shape index: {}]
  %s4 = inlined_call_operand.vmem [shape: f32[8,1], index: 4, kind: input, shape index: {}]
  %s5 = inlined_call_operand.vmem [shape: f32[1,278], index: 5, kind: input, shape index: {}]
  %s6 = inlined_call_operand.vmem [shape: f32[8,256], index: 6, kind: output, shape index: {}]
  %s7 = sld [smem:[#allocation0]]
  $region34: #{downg_forward.1} parent=0
    _
  %s9 = ssub.s32 1, %s7
  %s10 = scalar_select 0, %s9, %s7
  // Predicated region
  $region2: #{downg_forward.1} parent=0 // pred_check
    _
  $region3: #{downg_forward.1} parent=0 // pred_check_branch
    %12 = sbr.rel (0) target = $region5
  $region4: #{downg_forward.1} parent=0 // pred_region
    _
  $region5: #{downg_forward.1} parent=0 // pred_fallthru
    _
  // Predicated region
  $region6: #{downg_forward.1} parent=0 // pred_check
    _
  $region7: #{downg_forward.1} parent=0 // pred_check_branch
    %14 = sbr.rel (0) target = $region9
  $region8: #{downg_forward.1} parent=0 // pred_region
    _
  $region9: #{downg_forward.1} parent=0 // pred_fallthru
    _
  // Predicated region
  $region10: #{downg_forward.1} parent=0 // pred_check
    _
  $region11: #{downg_forward.1} parent=0 // pred_check_branch
    %16 = sbr.rel (0) target = $region13
  $region12: #{downg_forward.1} parent=0 // pred_region
    _
  $region13: #{downg_forward.1} parent=0 // pred_fallthru
    _
  // Predicated region
  $region14: #{downg_forward.1} parent=0 // pred_check
    _
  $region15: #{downg_forward.1} parent=0 // pred_check_branch
    %18 = sbr.rel (0) target = $region17
  $region16: #{downg_forward.1} parent=0 // pred_region
    _
  $region17: #{downg_forward.1} parent=0 // pred_fallthru
    _
  // Predicated region
  $region18: #{downg_forward.1} parent=0 // pred_check
    _
  $region19: #{downg_forward.1} parent=0 // pred_check_branch
    %20 = sbr.rel (0) target = $region21
  $region20: #{downg_forward.1} parent=0 // pred_region
    _
  $region21: #{downg_forward.1} parent=0 // pred_fallthru
    _
  // Predicated region
  $region22: #{downg_forward.1} parent=0 // pred_check
    _
  $region23: #{downg_forward.1} parent=0 // pred_check_branch
    %22 = sbr.rel (0) target = $region25
  $region24: #{downg_forward.1} parent=0 // pred_region
    _
  $region25: #{downg_forward.1} parent=0 // pred_fallthru
    _
  %v23 = vld [vmem:[%s1] sm:$0xff]
  %v24 = vld [vmem:[%s0] sm:$0xff]
  %v25 = vld [vmem:[%s0 + $0x8] sm:$0xff]
  %v26 = vld [vmem:[%s0 + $0x10] sm:$0xff]
  %v27 = vld [vmem:[%s0 + $0x18] sm:$0xff]
  %v28 = vld [vmem:[%s0 + $0x20] sm:$0xff]
  %v29 = vld [vmem:[%s0 + $0x28] sm:$0xff]
  %v30 = vld [vmem:[%s0 + $0x30] sm:$0xff]
  %v31 = vld [vmem:[%s0 + $0x38] sm:$0xff]
  %v32 = vld [vmem:[%s0 + $0x40] sm:$0xff]
  %v33 = vld [vmem:[%s0 + $0x48] sm:$0xff]
  %v34 = vld [vmem:[%s0 + $0x50] sm:$0xff]
  %v35 = vld [vmem:[%s0 + $0x58] sm:$0xff]
  %v36 = vld [vmem:[%s0 + $0x60] sm:$0xf]
  %v37 = vld [vmem:[%s0 + $0x68] sm:$0xf]
  %v38 = vld [vmem:[%s0 + $0x70] sm:$0xf]
  %v39 = vld [vmem:[%s2] sm:$0xff]
  %41 = vset.pattern.permute.xlu0 0
  %42 = vperm.xlu0 %41, %v39
  %v43 = vpop.permute.xlu0 %42
  %vm45 = vcmask 293888
  %v47 = vsel %vm45, %v23, 0
  %vm49 = vcmask 1043456
  %v51 = vsel %vm49, %v36, 0
  %v54 = vsel %vm49, %v37, 0
  %v57 = vsel %vm49, %v38, 0
  %v59 = vand.u32 %v25, 4294901760
  %60 = vmatprep.subr.mxu0 %v59
  %v61 = vand.u32 %v24, 4294901760
  %62 = vmatpush1.msra.mxu0 %v61
  %v63 = vand.u32 %v28, 4294901760
  %64 = vmatprep.subr.mxu0 %v63
  %v65 = vand.u32 %v27, 4294901760
  %66 = vmatpush1.msra.mxu0 %v65
  %v67 = vand.u32 %v31, 4294901760
  %68 = vmatprep.subr.mxu0 %v67
  %v69 = vand.u32 %v30, 4294901760
  %70 = vmatpush1.msra.mxu0 %v69
  %v71 = vand.u32 %v34, 4294901760
  %72 = vmatprep.subr.mxu0 %v71
  %v73 = vand.u32 %v33, 4294901760
  %74 = vmatpush1.msra.mxu0 %v73
  %v75 = vand.u32 %v54, 4294901760
  %76 = vmatprep.subr.mxu0 %v75
  %v77 = vand.u32 %v51, 4294901760
  %78 = vmatpush1.msra.mxu0 %v77
  %79 = vmatprep.subr.mxu0 0.0
  %80 = vmatpush1.msra.mxu0 0.0
  %81 = vmatprep.subr.mxu0 0.0
  %82 = vmatpush1.msra.mxu0 0.0
  %83 = vmatprep.subr.mxu0 0.0
  %84 = vmatpush1.msra.mxu0 0.0
  %85 = vmatprep.subr.mxu0 0.0
  %86 = vmatpush1.msra.mxu0 0.0
  %87 = vmatprep.subr.mxu0 0.0
  %88 = vmatpush1.msra.mxu0 0.0
  %89 = vmatprep.subr.mxu0 0.0
  %90 = vmatpush1.msra.mxu0 0.0
  %91 = vmatprep.subr.mxu0 0.0
  %92 = vmatpush1.msra.mxu0 0.0
  %93 = vmatprep.subr.mxu0 0.0
  %94 = vmatpush1.msra.mxu0 0.0
  %95 = vmatprep.subr.mxu0 0.0
  %96 = vmatpush1.msra.mxu0 0.0
  %97 = vmatprep.subr.mxu0 0.0
  %98 = vmatpush1.msra.mxu0 0.0
  %99 = vmatprep.subr.mxu0 0.0
  %100 = vmatpush1.msra.mxu0 0.0
  %101 = vmatprep.subr.mxu0 0.0
  %102 = vmatpush1.msra.mxu0 0.0
  %103 = vmatprep.subr.mxu0 0.0
  %104 = vmatpush1.msra.mxu0 0.0
  %105 = vmatprep.subr.mxu0 0.0
  %106 = vmatpush1.msra.mxu0 0.0
  %107 = vmatprep.subr.mxu0 0.0
  %108 = vmatpush1.msra.mxu0 0.0
  %109 = vmatprep.subr.mxu0 0.0
  %110 = vmatpush1.msra.mxu0 0.0
  %111 = vmatprep.subr.mxu0 0.0
  %112 = vmatpush1.msra.mxu0 0.0
  %113 = vmatprep.subr.mxu0 0.0
  %114 = vmatpush1.msra.mxu0 0.0
  %115 = vmatprep.subr.mxu0 0.0
  %116 = vmatpush1.msra.mxu0 0.0
  %117 = vmatprep.subr.mxu0 0.0
  %118 = vmatpush1.msra.mxu0 0.0
  %119 = vmatprep.subr.mxu0 0.0
  %120 = vmatpush1.msra.mxu0 0.0
  %121 = vmatprep.subr.mxu0 0.0
  %122 = vmatpush1.msra.mxu0 0.0
  %123 = vmatprep.subr.mxu0 0.0
  %124 = vmatpush1.msra.mxu0 0.0
  %125 = vmatprep.subr.mxu0 0.0
  %126 = vmatpush1.msra.mxu0 0.0
  %127 = vmatprep.subr.mxu0 0.0
  %128 = vmatpush1.msra.mxu0 0.0
  %129 = vmatprep.subr.mxu0 0.0
  %130 = vmatpush1.msra.mxu0 0.0
  %131 = vmatprep.subr.mxu0 0.0
  %132 = vmatpush1.msra.mxu0 0.0
  %133 = vmatprep.mubr.f32.mxu0 0.0
  %v134 = vand.u32 %v47, 4294901760
  %v135 = vsub.f32 %v47, %v134
  %v136 = vand.u32 %v135, 4294901760
  %v137 = vsub.f32 %v135, %v136
  %v138 = vand.u32 %v137, 4294901760
  %139 = vmatmul.mubr.f32.gmra.mrb[0].mxu0 %v138
  %v140 = vpop.f32.mrb[0].mxu0
  %v141 = vadd.f32 %v43, %v140
  %v142 = vpop.f32.mrb[0].mxu0
  %v143 = vadd.f32 %v43, %v142
  %144 = vdwg.mxu0
  %v145 = vand.u32 %v25, 4294901760
  %v146 = vsub.f32 %v25, %v145
  %v147 = vand.u32 %v146, 4294901760
  %v148 = vsub.f32 %v146, %v147
  %v149 = vand.u32 %v148, 4294901760
  %150 = vmatprep.subr.mxu0 %v149
  %v151 = vand.u32 %v24, 4294901760
  %v152 = vsub.f32 %v24, %v151
  %v153 = vand.u32 %v152, 4294901760
  %v154 = vsub.f32 %v152, %v153
  %v155 = vand.u32 %v154, 4294901760
  %156 = vmatpush1.msra.mxu0 %v155
  %v157 = vand.u32 %v28, 4294901760
  %v158 = vsub.f32 %v28, %v157
  %v159 = vand.u32 %v158, 4294901760
  %v160 = vsub.f32 %v158, %v159
  %v161 = vand.u32 %v160, 4294901760
  %162 = vmatprep.subr.mxu0 %v161
  %v163 = vand.u32 %v27, 4294901760
  %v164 = vsub.f32 %v27, %v163
  %v165 = vand.u32 %v164, 4294901760
  %v166 = vsub.f32 %v164, %v165
  %v167 = vand.u32 %v166, 4294901760
  %168 = vmatpush1.msra.mxu0 %v167
  %v169 = vand.u32 %v31, 4294901760
  %v170 = vsub.f32 %v31, %v169
  %v171 = vand.u32 %v170, 4294901760
  %v172 = vsub.f32 %v170, %v171
  %v173 = vand.u32 %v172, 4294901760
  %174 = vmatprep.subr.mxu0 %v173
  %v175 = vand.u32 %v30, 4294901760
  %v176 = vsub.f32 %v30, %v175
  %v177 = vand.u32 %v176, 4294901760
  %v178 = vsub.f32 %v176, %v177
  %v179 = vand.u32 %v178, 4294901760
  %180 = vmatpush1.msra.mxu0 %v179
  %v181 = vand.u32 %v34, 4294901760
  %v182 = vsub.f32 %v34, %v181
  %v183 = vand.u32 %v182, 4294901760
  %v184 = vsub.f32 %v182, %v183
  %v185 = vand.u32 %v184, 4294901760
  %186 = vmatprep.subr.mxu0 %v185
  %v187 = vand.u32 %v33, 4294901760
  %v188 = vsub.f32 %v33, %v187
  %v189 = vand.u32 %v188, 4294901760
  %v190 = vsub.f32 %v188, %v189
  %v191 = vand.u32 %v190, 4294901760
  %192 = vmatpush1.msra.mxu0 %v191
  %v193 = vand.u32 %v54, 4294901760
  %v194 = vsub.f32 %v54, %v193
  %v195 = vand.u32 %v194, 4294901760
  %v196 = vsub.f32 %v194, %v195
  %v197 = vand.u32 %v196, 4294901760
  %198 = vmatprep.subr.mxu0 %v197
  %v199 = vand.u32 %v51, 4294901760
  %v200 = vsub.f32 %v51, %v199
  %v201 = vand.u32 %v200, 4294901760
  %v202 = vsub.f32 %v200, %v201
  %v203 = vand.u32 %v202, 4294901760
  %204 = vmatpush1.msra.mxu0 %v203
  %205 = vmatprep.subr.mxu0 0.0
  %206 = vmatpush1.msra.mxu0 0.0
  %207 = vmatprep.subr.mxu0 0.0
  %208 = vmatpush1.msra.mxu0 0.0
  %209 = vmatprep.subr.mxu0 0.0
  %210 = vmatpush1.msra.mxu0 0.0
  %211 = vmatprep.subr.mxu0 0.0
  %212 = vmatpush1.msra.mxu0 0.0
  %213 = vmatprep.subr.mxu0 0.0
  %214 = vmatpush1.msra.mxu0 0.0
  %215 = vmatprep.subr.mxu0 0.0
  %216 = vmatpush1.msra.mxu0 0.0
  %217 = vmatprep.subr.mxu0 0.0
  %218 = vmatpush1.msra.mxu0 0.0
  %219 = vmatprep.subr.mxu0 0.0
  %220 = vmatpush1.msra.mxu0 0.0
  %221 = vmatprep.subr.mxu0 0.0
  %222 = vmatpush1.msra.mxu0 0.0
  %223 = vmatprep.subr.mxu0 0.0
  %224 = vmatpush1.msra.mxu0 0.0
  %225 = vmatprep.subr.mxu0 0.0
  %226 = vmatpush1.msra.mxu0 0.0
  %227 = vmatprep.subr.mxu0 0.0
  %228 = vmatpush1.msra.mxu0 0.0
  %229 = vmatprep.subr.mxu0 0.0
  %230 = vmatpush1.msra.mxu0 0.0
  %231 = vmatprep.subr.mxu0 0.0
  %232 = vmatpush1.msra.mxu0 0.0
  %233 = vmatprep.subr.mxu0 0.0
  %234 = vmatpush1.msra.mxu0 0.0
  %235 = vmatprep.subr.mxu0 0.0
  %236 = vmatpush1.msra.mxu0 0.0
  %237 = vmatprep.subr.mxu0 0.0
  %238 = vmatpush1.msra.mxu0 0.0
  %239 = vmatprep.subr.mxu0 0.0
  %240 = vmatpush1.msra.mxu0 0.0
  %241 = vmatprep.subr.mxu0 0.0
  %242 = vmatpush1.msra.mxu0 0.0
  %243 = vmatprep.subr.mxu0 0.0
  %244 = vmatpush1.msra.mxu0 0.0
  %245 = vmatprep.subr.mxu0 0.0
  %246 = vmatpush1.msra.mxu0 0.0
  %247 = vmatprep.subr.mxu0 0.0
  %248 = vmatpush1.msra.mxu0 0.0
  %249 = vmatprep.subr.mxu0 0.0
  %250 = vmatpush1.msra.mxu0 0.0
  %251 = vmatprep.subr.mxu0 0.0
  %252 = vmatpush1.msra.mxu0 0.0
  %253 = vmatprep.subr.mxu0 0.0
  %254 = vmatpush1.msra.mxu0 0.0
  %255 = vmatprep.subr.mxu0 0.0
  %256 = vmatpush1.msra.mxu0 0.0
  %257 = vmatprep.subr.mxu0 0.0
  %258 = vmatpush1.msra.mxu0 0.0
  %259 = vmatprep.mubr.f32.mxu0 0.0
  %v260 = vand.u32 %v47, 4294901760
  %261 = vmatmul.mubr.f32.gmra.mrb[0].mxu0 %v260
  %v262 = vpop.f32.mrb[0].mxu0
  %v263 = vadd.f32 %v141, %v262
  %v264 = vpop.f32.mrb[0].mxu0
  %v265 = vadd.f32 %v143, %v264
  %266 = vdwg.mxu0
  %v267 = vand.u32 %v25, 4294901760
  %v268 = vsub.f32 %v25, %v267
  %269 = vmatprep.subr.mxu0 %v268
  %v270 = vand.u32 %v24, 4294901760
  %v271 = vsub.f32 %v24, %v270
  %272 = vmatpush1.msra.mxu0 %v271
  %v273 = vand.u32 %v28, 4294901760
  %v274 = vsub.f32 %v28, %v273
  %275 = vmatprep.subr.mxu0 %v274
  %v276 = vand.u32 %v27, 4294901760
  %v277 = vsub.f32 %v27, %v276
  %278 = vmatpush1.msra.mxu0 %v277
  %v279 = vand.u32 %v31, 4294901760
  %v280 = vsub.f32 %v31, %v279
  %281 = vmatprep.subr.mxu0 %v280
  %v282 = vand.u32 %v30, 4294901760
  %v283 = vsub.f32 %v30, %v282
  %284 = vmatpush1.msra.mxu0 %v283
  %v285 = vand.u32 %v34, 4294901760
  %v286 = vsub.f32 %v34, %v285
  %287 = vmatprep.subr.mxu0 %v286
  %v288 = vand.u32 %v33, 4294901760
  %v289 = vsub.f32 %v33, %v288
  %290 = vmatpush1.msra.mxu0 %v289
  %v291 = vand.u32 %v54, 4294901760
  %v292 = vsub.f32 %v54, %v291
  %293 = vmatprep.subr.mxu0 %v292
  %v294 = vand.u32 %v51, 4294901760
  %v295 = vsub.f32 %v51, %v294
  %296 = vmatpush1.msra.mxu0 %v295
  %297 = vmatprep.subr.mxu0 0.0
  %298 = vmatpush1.msra.mxu0 0.0
  %299 = vmatprep.subr.mxu0 0.0
  %300 = vmatpush1.msra.mxu0 0.0
  %301 = vmatprep.subr.mxu0 0.0
  %302 = vmatpush1.msra.mxu0 0.0
  %303 = vmatprep.subr.mxu0 0.0
  %304 = vmatpush1.msra.mxu0 0.0
  %305 = vmatprep.subr.mxu0 0.0
  %306 = vmatpush1.msra.mxu0 0.0
  %307 = vmatprep.subr.mxu0 0.0
  %308 = vmatpush1.msra.mxu0 0.0
  %309 = vmatprep.subr.mxu0 0.0
  %310 = vmatpush1.msra.mxu0 0.0
  %311 = vmatprep.subr.mxu0 0.0
  %312 = vmatpush1.msra.mxu0 0.0
  %313 = vmatprep.subr.mxu0 0.0
  %314 = vmatpush1.msra.mxu0 0.0
  %315 = vmatprep.subr.mxu0 0.0
  %316 = vmatpush1.msra.mxu0 0.0
  %317 = vmatprep.subr.mxu0 0.0
  %318 = vmatpush1.msra.mxu0 0.0
  %319 = vmatprep.subr.mxu0 0.0
  %320 = vmatpush1.msra.mxu0 0.0
  %321 = vmatprep.subr.mxu0 0.0
  %322 = vmatpush1.msra.mxu0 0.0
  %323 = vmatprep.subr.mxu0 0.0
  %324 = vmatpush1.msra.mxu0 0.0
  %325 = vmatprep.subr.mxu0 0.0
  %326 = vmatpush1.msra.mxu0 0.0
  %327 = vmatprep.subr.mxu0 0.0
  %328 = vmatpush1.msra.mxu0 0.0
  %329 = vmatprep.subr.mxu0 0.0
  %330 = vmatpush1.msra.mxu0 0.0
  %331 = vmatprep.subr.mxu0 0.0
  %332 = vmatpush1.msra.mxu0 0.0
  %333 = vmatprep.subr.mxu0 0.0
  %334 = vmatpush1.msra.mxu0 0.0
  %335 = vmatprep.subr.mxu0 0.0
  %336 = vmatpush1.msra.mxu0 0.0
  %337 = vmatprep.subr.mxu0 0.0
  %338 = vmatpush1.msra.mxu0 0.0
  %339 = vmatprep.subr.mxu0 0.0
  %340 = vmatpush1.msra.mxu0 0.0
  %341 = vmatprep.subr.mxu0 0.0
  %342 = vmatpush1.msra.mxu0 0.0
  %343 = vmatprep.subr.mxu0 0.0
  %344 = vmatpush1.msra.mxu0 0.0
  %345 = vmatprep.subr.mxu0 0.0
  %346 = vmatpush1.msra.mxu0 0.0
  %347 = vmatprep.subr.mxu0 0.0
  %348 = vmatpush1.msra.mxu0 0.0
  %349 = vmatprep.subr.mxu0 0.0
  %350 = vmatpush1.msra.mxu0 0.0
  %351 = vmatprep.mubr.f32.mxu0 0.0
  %v352 = vand.u32 %v47, 4294901760
  %v353 = vsub.f32 %v47, %v352
  %354 = vmatmul.mubr.f32.gmra.mrb[0].mxu0 %v353
  %v355 = vpop.f32.mrb[0].mxu0
  %v356 = vadd.f32 %v263, %v355
  %v357 = vpop.f32.mrb[0].mxu0
  %v358 = vadd.f32 %v265, %v357
  %359 = vdwg.mxu0
  %v360 = vand.u32 %v25, 4294901760
  %361 = vmatprep.subr.mxu0 %v360
  %v362 = vand.u32 %v24, 4294901760
  %363 = vmatpush1.msra.mxu0 %v362
  %v364 = vand.u32 %v28, 4294901760
  %365 = vmatprep.subr.mxu0 %v364
  %v366 = vand.u32 %v27, 4294901760
  %367 = vmatpush1.msra.mxu0 %v366
  %v368 = vand.u32 %v31, 4294901760
  %369 = vmatprep.subr.mxu0 %v368
  %v370 = vand.u32 %v30, 4294901760
  %371 = vmatpush1.msra.mxu0 %v370
  %v372 = vand.u32 %v34, 4294901760
  %373 = vmatprep.subr.mxu0 %v372
  %v374 = vand.u32 %v33, 4294901760
  %375 = vmatpush1.msra.mxu0 %v374
  %v376 = vand.u32 %v54, 4294901760
  %377 = vmatprep.subr.mxu0 %v376
  %v378 = vand.u32 %v51, 4294901760
  %379 = vmatpush1.msra.mxu0 %v378
  %380 = vmatprep.subr.mxu0 0.0
  %381 = vmatpush1.msra.mxu0 0.0
  %382 = vmatprep.subr.mxu0 0.0
  %383 = vmatpush1.msra.mxu0 0.0
  %384 = vmatprep.subr.mxu0 0.0
  %385 = vmatpush1.msra.mxu0 0.0
  %386 = vmatprep.subr.mxu0 0.0
  %387 = vmatpush1.msra.mxu0 0.0
  %388 = vmatprep.subr.mxu0 0.0
  %389 = vmatpush1.msra.mxu0 0.0
  %390 = vmatprep.subr.mxu0 0.0
  %391 = vmatpush1.msra.mxu0 0.0
  %392 = vmatprep.subr.mxu0 0.0
  %393 = vmatpush1.msra.mxu0 0.0
  %394 = vmatprep.subr.mxu0 0.0
  %395 = vmatpush1.msra.mxu0 0.0
  %396 = vmatprep.subr.mxu0 0.0
  %397 = vmatpush1.msra.mxu0 0.0
  %398 = vmatprep.subr.mxu0 0.0
  %399 = vmatpush1.msra.mxu0 0.0
  %400 = vmatprep.subr.mxu0 0.0
  %401 = vmatpush1.msra.mxu0 0.0
  %402 = vmatprep.subr.mxu0 0.0
  %403 = vmatpush1.msra.mxu0 0.0
  %404 = vmatprep.subr.mxu0 0.0
  %405 = vmatpush1.msra.mxu0 0.0
  %406 = vmatprep.subr.mxu0 0.0
  %407 = vmatpush1.msra.mxu0 0.0
  %408 = vmatprep.subr.mxu0 0.0
  %409 = vmatpush1.msra.mxu0 0.0
  %410 = vmatprep.subr.mxu0 0.0
  %411 = vmatpush1.msra.mxu0 0.0
  %412 = vmatprep.subr.mxu0 0.0
  %413 = vmatpush1.msra.mxu0 0.0
  %414 = vmatprep.subr.mxu0 0.0
  %415 = vmatpush1.msra.mxu0 0.0
  %416 = vmatprep.subr.mxu0 0.0
  %417 = vmatpush1.msra.mxu0 0.0
  %418 = vmatprep.subr.mxu0 0.0
  %419 = vmatpush1.msra.mxu0 0.0
  %420 = vmatprep.subr.mxu0 0.0
  %421 = vmatpush1.msra.mxu0 0.0
  %422 = vmatprep.subr.mxu0 0.0
  %423 = vmatpush1.msra.mxu0 0.0
  %424 = vmatprep.subr.mxu0 0.0
  %425 = vmatpush1.msra.mxu0 0.0
  %426 = vmatprep.subr.mxu0 0.0
  %427 = vmatpush1.msra.mxu0 0.0
  %428 = vmatprep.subr.mxu0 0.0
  %429 = vmatpush1.msra.mxu0 0.0
  %430 = vmatprep.subr.mxu0 0.0
  %431 = vmatpush1.msra.mxu0 0.0
  %432 = vmatprep.subr.mxu0 0.0
  %433 = vmatpush1.msra.mxu0 0.0
  %434 = vmatprep.mubr.f32.mxu0 0.0
  %v435 = vand.u32 %v47, 4294901760
  %v436 = vsub.f32 %v47, %v435
  %v437 = vand.u32 %v436, 4294901760
  %438 = vmatmul.mubr.f32.gmra.mrb[0].mxu0 %v437
  %v439 = vpop.f32.mrb[0].mxu0
  %v440 = vadd.f32 %v356, %v439
  %v441 = vpop.f32.mrb[0].mxu0
  %v442 = vadd.f32 %v358, %v441
  %443 = vdwg.mxu0
  %v444 = vand.u32 %v25, 4294901760
  %v445 = vsub.f32 %v25, %v444
  %v446 = vand.u32 %v445, 4294901760
  %447 = vmatprep.subr.mxu0 %v446
  %v448 = vand.u32 %v24, 4294901760
  %v449 = vsub.f32 %v24, %v448
  %v450 = vand.u32 %v449, 4294901760
  %451 = vmatpush1.msra.mxu0 %v450
  %v452 = vand.u32 %v28, 4294901760
  %v453 = vsub.f32 %v28, %v452
  %v454 = vand.u32 %v453, 4294901760
  %455 = vmatprep.subr.mxu0 %v454
  %v456 = vand.u32 %v27, 4294901760
  %v457 = vsub.f32 %v27, %v456
  %v458 = vand.u32 %v457, 4294901760
  %459 = vmatpush1.msra.mxu0 %v458
  %v460 = vand.u32 %v31, 4294901760
  %v461 = vsub.f32 %v31, %v460
  %v462 = vand.u32 %v461, 4294901760
  %463 = vmatprep.subr.mxu0 %v462
  %v464 = vand.u32 %v30, 4294901760
  %v465 = vsub.f32 %v30, %v464
  %v466 = vand.u32 %v465, 4294901760
  %467 = vmatpush1.msra.mxu0 %v466
  %v468 = vand.u32 %v34, 4294901760
  %v469 = vsub.f32 %v34, %v468
  %v470 = vand.u32 %v469, 4294901760
  %471 = vmatprep.subr.mxu0 %v470
  %v472 = vand.u32 %v33, 4294901760
  %v473 = vsub.f32 %v33, %v472
  %v474 = vand.u32 %v473, 4294901760
  %475 = vmatpush1.msra.mxu0 %v474
  %v476 = vand.u32 %v54, 4294901760
  %v477 = vsub.f32 %v54, %v476
  %v478 = vand.u32 %v477, 4294901760
  %479 = vmatprep.subr.mxu0 %v478
  %v480 = vand.u32 %v51, 4294901760
  %v481 = vsub.f32 %v51, %v480
  %v482 = vand.u32 %v481, 4294901760
  %483 = vmatpush1.msra.mxu0 %v482
  %484 = vmatprep.subr.mxu0 0.0
  %485 = vmatpush1.msra.mxu0 0.0
  %486 = vmatprep.subr.mxu0 0.0
  %487 = vmatpush1.msra.mxu0 0.0
  %488 = vmatprep.subr.mxu0 0.0
  %489 = vmatpush1.msra.mxu0 0.0
  %490 = vmatprep.subr.mxu0 0.0
  %491 = vmatpush1.msra.mxu0 0.0
  %492 = vmatprep.subr.mxu0 0.0
  %493 = vmatpush1.msra.mxu0 0.0
  %494 = vmatprep.subr.mxu0 0.0
  %495 = vmatpush1.msra.mxu0 0.0
  %496 = vmatprep.subr.mxu0 0.0
  %497 = vmatpush1.msra.mxu0 0.0
  %498 = vmatprep.subr.mxu0 0.0
  %499 = vmatpush1.msra.mxu0 0.0
  %500 = vmatprep.subr.mxu0 0.0
  %501 = vmatpush1.msra.mxu0 0.0
  %502 = vmatprep.subr.mxu0 0.0
  %503 = vmatpush1.msra.mxu0 0.0
  %504 = vmatprep.subr.mxu0 0.0
  %505 = vmatpush1.msra.mxu0 0.0
  %506 = vmatprep.subr.mxu0 0.0
  %507 = vmatpush1.msra.mxu0 0.0
  %508 = vmatprep.subr.mxu0 0.0
  %509 = vmatpush1.msra.mxu0 0.0
  %510 = vmatprep.subr.mxu0 0.0
  %511 = vmatpush1.msra.mxu0 0.0
  %512 = vmatprep.subr.mxu0 0.0
  %513 = vmatpush1.msra.mxu0 0.0
  %514 = vmatprep.subr.mxu0 0.0
  %515 = vmatpush1.msra.mxu0 0.0
  %516 = vmatprep.subr.mxu0 0.0
  %517 = vmatpush1.msra.mxu0 0.0
  %518 = vmatprep.subr.mxu0 0.0
  %519 = vmatpush1.msra.mxu0 0.0
  %520 = vmatprep.subr.mxu0 0.0
  %521 = vmatpush1.msra.mxu0 0.0
  %522 = vmatprep.subr.mxu0 0.0
  %523 = vmatpush1.msra.mxu0 0.0
  %524 = vmatprep.subr.mxu0 0.0
  %525 = vmatpush1.msra.mxu0 0.0
  %526 = vmatprep.subr.mxu0 0.0
  %527 = vmatpush1.msra.mxu0 0.0
  %528 = vmatprep.subr.mxu0 0.0
  %529 = vmatpush1.msra.mxu0 0.0
  %530 = vmatprep.subr.mxu0 0.0
  %531 = vmatpush1.msra.mxu0 0.0
  %532 = vmatprep.subr.mxu0 0.0
  %533 = vmatpush1.msra.mxu0 0.0
  %534 = vmatprep.subr.mxu0 0.0
  %535 = vmatpush1.msra.mxu0 0.0
  %536 = vmatprep.subr.mxu0 0.0
  %537 = vmatpush1.msra.mxu0 0.0
  %538 = vmatprep.mubr.f32.mxu0 0.0
  %v539 = vand.u32 %v47, 4294901760
  %540 = vmatmul.mubr.f32.gmra.mrb[0].mxu0 %v539
  %v541 = vpop.f32.mrb[0].mxu0
  %v542 = vadd.f32 %v440, %v541
  %v543 = vpop.f32.mrb[0].mxu0
  %v544 = vadd.f32 %v442, %v543
  %545 = vdwg.mxu0
  %v546 = vand.u32 %v25, 4294901760
  %547 = vmatprep.subr.mxu0 %v546
  %v548 = vand.u32 %v24, 4294901760
  %549 = vmatpush1.msra.mxu0 %v548
  %v550 = vand.u32 %v28, 4294901760
  %551 = vmatprep.subr.mxu0 %v550
  %v552 = vand.u32 %v27, 4294901760
  %553 = vmatpush1.msra.mxu0 %v552
  %v554 = vand.u32 %v31, 4294901760
  %555 = vmatprep.subr.mxu0 %v554
  %v556 = vand.u32 %v30, 4294901760
  %557 = vmatpush1.msra.mxu0 %v556
  %v558 = vand.u32 %v34, 4294901760
  %559 = vmatprep.subr.mxu0 %v558
  %v560 = vand.u32 %v33, 4294901760
  %561 = vmatpush1.msra.mxu0 %v560
  %v562 = vand.u32 %v54, 4294901760
  %563 = vmatprep.subr.mxu0 %v562
  %v564 = vand.u32 %v51, 4294901760
  %565 = vmatpush1.msra.mxu0 %v564
  %566 = vmatprep.subr.mxu0 0.0
  %567 = vmatpush1.msra.mxu0 0.0
  %568 = vmatprep.subr.mxu0 0.0
  %569 = vmatpush1.msra.mxu0 0.0
  %570 = vmatprep.subr.mxu0 0.0
  %571 = vmatpush1.msra.mxu0 0.0
  %572 = vmatprep.subr.mxu0 0.0
  %573 = vmatpush1.msra.mxu0 0.0
  %574 = vmatprep.subr.mxu0 0.0
  %575 = vmatpush1.msra.mxu0 0.0
  %576 = vmatprep.subr.mxu0 0.0
  %577 = vmatpush1.msra.mxu0 0.0
  %578 = vmatprep.subr.mxu0 0.0
  %579 = vmatpush1.msra.mxu0 0.0
  %580 = vmatprep.subr.mxu0 0.0
  %581 = vmatpush1.msra.mxu0 0.0
  %582 = vmatprep.subr.mxu0 0.0
  %583 = vmatpush1.msra.mxu0 0.0
  %584 = vmatprep.subr.mxu0 0.0
  %585 = vmatpush1.msra.mxu0 0.0
  %586 = vmatprep.subr.mxu0 0.0
  %587 = vmatpush1.msra.mxu0 0.0
  %588 = vmatprep.subr.mxu0 0.0
  %589 = vmatpush1.msra.mxu0 0.0
  %590 = vmatprep.subr.mxu0 0.0
  %591 = vmatpush1.msra.mxu0 0.0
  %592 = vmatprep.subr.mxu0 0.0
  %593 = vmatpush1.msra.mxu0 0.0
  %594 = vmatprep.subr.mxu0 0.0
  %595 = vmatpush1.msra.mxu0 0.0
  %596 = vmatprep.subr.mxu0 0.0
  %597 = vmatpush1.msra.mxu0 0.0
  %598 = vmatprep.subr.mxu0 0.0
  %599 = vmatpush1.msra.mxu0 0.0
  %600 = vmatprep.subr.mxu0 0.0
  %601 = vmatpush1.msra.mxu0 0.0
  %602 = vmatprep.subr.mxu0 0.0
  %603 = vmatpush1.msra.mxu0 0.0
  %604 = vmatprep.subr.mxu0 0.0
  %605 = vmatpush1.msra.mxu0 0.0
  %606 = vmatprep.subr.mxu0 0.0
  %607 = vmatpush1.msra.mxu0 0.0
  %608 = vmatprep.subr.mxu0 0.0
  %609 = vmatpush1.msra.mxu0 0.0
  %610 = vmatprep.subr.mxu0 0.0
  %611 = vmatpush1.msra.mxu0 0.0
  %612 = vmatprep.subr.mxu0 0.0
  %613 = vmatpush1.msra.mxu0 0.0
  %614 = vmatprep.subr.mxu0 0.0
  %615 = vmatpush1.msra.mxu0 0.0
  %616 = vmatprep.subr.mxu0 0.0
  %617 = vmatpush1.msra.mxu0 0.0
  %618 = vmatprep.subr.mxu0 0.0
  %619 = vmatpush1.msra.mxu0 0.0
  %620 = vmatprep.mubr.f32.mxu0 0.0
  %v621 = vand.u32 %v47, 4294901760
  %622 = vmatmul.mubr.f32.gmra.mrb[0].mxu0 %v621
  %v623 = vpop.f32.mrb[0].mxu0
  %v624 = vadd.f32 %v542, %v623
  %v625 = vpop.f32.mrb[0].mxu0
  %v626 = vadd.f32 %v544, %v625
  %627 = vdwg.mxu0
  %628 = vmatprep.subr.mxu0 0.0
  %v629 = vand.u32 %v26, 4294901760
  %630 = vmatpush1.msra.mxu0 %v629
  %631 = vmatprep.subr.mxu0 0.0
  %v632 = vand.u32 %v29, 4294901760
  %633 = vmatpush1.msra.mxu0 %v632
  %634 = vmatprep.subr.mxu0 0.0
  %v635 = vand.u32 %v32, 4294901760
  %636 = vmatpush1.msra.mxu0 %v635
  %637 = vmatprep.subr.mxu0 0.0
  %v638 = vand.u32 %v35, 4294901760
  %639 = vmatpush1.msra.mxu0 %v638
  %640 = vmatprep.subr.mxu0 0.0
  %v641 = vand.u32 %v57, 4294901760
  %642 = vmatpush1.msra.mxu0 %v641
  %643 = vmatprep.subr.mxu0 0.0
  %644 = vmatpush1.msra.mxu0 0.0
  %645 = vmatprep.subr.mxu0 0.0
  %646 = vmatpush1.msra.mxu0 0.0
  %647 = vmatprep.subr.mxu0 0.0
  %648 = vmatpush1.msra.mxu0 0.0
  %649 = vmatprep.subr.mxu0 0.0
  %650 = vmatpush1.msra.mxu0 0.0
  %651 = vmatprep.subr.mxu0 0.0
  %652 = vmatpush1.msra.mxu0 0.0
  %653 = vmatprep.subr.mxu0 0.0
  %654 = vmatpush1.msra.mxu0 0.0
  %655 = vmatprep.subr.mxu0 0.0
  %656 = vmatpush1.msra.mxu0 0.0
  %657 = vmatprep.subr.mxu0 0.0
  %658 = vmatpush1.msra.mxu0 0.0
  %659 = vmatprep.subr.mxu0 0.0
  %660 = vmatpush1.msra.mxu0 0.0
  %661 = vmatprep.subr.mxu0 0.0
  %662 = vmatpush1.msra.mxu0 0.0
  %663 = vmatprep.subr.mxu0 0.0
  %664 = vmatpush1.msra.mxu0 0.0
  %665 = vmatprep.subr.mxu0 0.0
  %666 = vmatpush1.msra.mxu0 0.0
  %667 = vmatprep.subr.mxu0 0.0
  %668 = vmatpush1.msra.mxu0 0.0
  %669 = vmatprep.subr.mxu0 0.0
  %670 = vmatpush1.msra.mxu0 0.0
  %671 = vmatprep.subr.mxu0 0.0
  %672 = vmatpush1.msra.mxu0 0.0
  %673 = vmatprep.subr.mxu0 0.0
  %674 = vmatpush1.msra.mxu0 0.0
  %675 = vmatprep.subr.mxu0 0.0
  %676 = vmatpush1.msra.mxu0 0.0
  %677 = vmatprep.subr.mxu0 0.0
  %678 = vmatpush1.msra.mxu0 0.0
  %679 = vmatprep.subr.mxu0 0.0
  %680 = vmatpush1.msra.mxu0 0.0
  %681 = vmatprep.subr.mxu0 0.0
  %682 = vmatpush1.msra.mxu0 0.0
  %683 = vmatprep.subr.mxu0 0.0
  %684 = vmatpush1.msra.mxu0 0.0
  %685 = vmatprep.subr.mxu0 0.0
  %686 = vmatpush1.msra.mxu0 0.0
  %687 = vmatprep.subr.mxu0 0.0
  %688 = vmatpush1.msra.mxu0 0.0
  %689 = vmatprep.subr.mxu0 0.0
  %690 = vmatpush1.msra.mxu0 0.0
  %691 = vmatprep.subr.mxu0 0.0
  %692 = vmatpush1.msra.mxu0 0.0
  %693 = vmatprep.subr.mxu0 0.0
  %694 = vmatpush1.msra.mxu0 0.0
  %695 = vmatprep.subr.mxu0 0.0
  %696 = vmatpush1.msra.mxu0 0.0
  %697 = vmatprep.mubr.f32.mxu0 0.0
  %v698 = vand.u32 %v47, 4294901760
  %v699 = vsub.f32 %v47, %v698
  %v700 = vand.u32 %v699, 4294901760
  %v701 = vsub.f32 %v699, %v700
  %v702 = vand.u32 %v701, 4294901760
  %703 = vmatmul.mubr.f32.gmra.mrb[0].mxu0 %v702
  %v704 = vpop.f32.mrb[0].mxu0
  %v705 = vadd.f32 %v43, %v704
  %v706 = vpop.f32.mrb[0].mxu0
  %707 = vdwg.mxu0
  %708 = vmatprep.subr.mxu0 0.0
  %v709 = vand.u32 %v26, 4294901760
  %v710 = vsub.f32 %v26, %v709
  %v711 = vand.u32 %v710, 4294901760
  %v712 = vsub.f32 %v710, %v711
  %v713 = vand.u32 %v712, 4294901760
  %714 = vmatpush1.msra.mxu0 %v713
  %715 = vmatprep.subr.mxu0 0.0
  %v716 = vand.u32 %v29, 4294901760
  %v717 = vsub.f32 %v29, %v716
  %v718 = vand.u32 %v717, 4294901760
  %v719 = vsub.f32 %v717, %v718
  %v720 = vand.u32 %v719, 4294901760
  %721 = vmatpush1.msra.mxu0 %v720
  %722 = vmatprep.subr.mxu0 0.0
  %v723 = vand.u32 %v32, 4294901760
  %v724 = vsub.f32 %v32, %v723
  %v725 = vand.u32 %v724, 4294901760
  %v726 = vsub.f32 %v724, %v725
  %v727 = vand.u32 %v726, 4294901760
  %728 = vmatpush1.msra.mxu0 %v727
  %729 = vmatprep.subr.mxu0 0.0
  %v730 = vand.u32 %v35, 4294901760
  %v731 = vsub.f32 %v35, %v730
  %v732 = vand.u32 %v731, 4294901760
  %v733 = vsub.f32 %v731, %v732
  %v734 = vand.u32 %v733, 4294901760
  %735 = vmatpush1.msra.mxu0 %v734
  %736 = vmatprep.subr.mxu0 0.0
  %v737 = vand.u32 %v57, 4294901760
  %v738 = vsub.f32 %v57, %v737
  %v739 = vand.u32 %v738, 4294901760
  %v740 = vsub.f32 %v738, %v739
  %v741 = vand.u32 %v740, 4294901760
  %742 = vmatpush1.msra.mxu0 %v741
  %743 = vmatprep.subr.mxu0 0.0
  %744 = vmatpush1.msra.mxu0 0.0
  %745 = vmatprep.subr.mxu0 0.0
  %746 = vmatpush1.msra.mxu0 0.0
  %747 = vmatprep.subr.mxu0 0.0
  %748 = vmatpush1.msra.mxu0 0.0
  %749 = vmatprep.subr.mxu0 0.0
  %750 = vmatpush1.msra.mxu0 0.0
  %751 = vmatprep.subr.mxu0 0.0
  %752 = vmatpush1.msra.mxu0 0.0
  %753 = vmatprep.subr.mxu0 0.0
  %754 = vmatpush1.msra.mxu0 0.0
  %755 = vmatprep.subr.mxu0 0.0
  %756 = vmatpush1.msra.mxu0 0.0
  %757 = vmatprep.subr.mxu0 0.0
  %758 = vmatpush1.msra.mxu0 0.0
  %759 = vmatprep.subr.mxu0 0.0
  %760 = vmatpush1.msra.mxu0 0.0
  %761 = vmatprep.subr.mxu0 0.0
  %762 = vmatpush1.msra.mxu0 0.0
  %763 = vmatprep.subr.mxu0 0.0
  %764 = vmatpush1.msra.mxu0 0.0
  %765 = vmatprep.subr.mxu0 0.0
  %766 = vmatpush1.msra.mxu0 0.0
  %767 = vmatprep.subr.mxu0 0.0
  %768 = vmatpush1.msra.mxu0 0.0
  %769 = vmatprep.subr.mxu0 0.0
  %770 = vmatpush1.msra.mxu0 0.0
  %771 = vmatprep.subr.mxu0 0.0
  %772 = vmatpush1.msra.mxu0 0.0
  %773 = vmatprep.subr.mxu0 0.0
  %774 = vmatpush1.msra.mxu0 0.0
  %775 = vmatprep.subr.mxu0 0.0
  %776 = vmatpush1.msra.mxu0 0.0
  %777 = vmatprep.subr.mxu0 0.0
  %778 = vmatpush1.msra.mxu0 0.0
  %779 = vmatprep.subr.mxu0 0.0
  %780 = vmatpush1.msra.mxu0 0.0
  %781 = vmatprep.subr.mxu0 0.0
  %782 = vmatpush1.msra.mxu0 0.0
  %783 = vmatprep.subr.mxu0 0.0
  %784 = vmatpush1.msra.mxu0 0.0
  %785 = vmatprep.subr.mxu0 0.0
  %786 = vmatpush1.msra.mxu0 0.0
  %787 = vmatprep.subr.mxu0 0.0
  %788 = vmatpush1.msra.mxu0 0.0
  %789 = vmatprep.subr.mxu0 0.0
  %790 = vmatpush1.msra.mxu0 0.0
  %791 = vmatprep.subr.mxu0 0.0
  %792 = vmatpush1.msra.mxu0 0.0
  %793 = vmatprep.subr.mxu0 0.0
  %794 = vmatpush1.msra.mxu0 0.0
  %795 = vmatprep.subr.mxu0 0.0
  %796 = vmatpush1.msra.mxu0 0.0
  %797 = vmatprep.mubr.f32.mxu0 0.0
  %v798 = vand.u32 %v47, 4294901760
  %799 = vmatmul.mubr.f32.gmra.mrb[0].mxu0 %v798
  %v800 = vpop.f32.mrb[0].mxu0
  %v801 = vadd.f32 %v705, %v800
  %v802 = vpop.f32.mrb[0].mxu0
  %803 = vdwg.mxu0
  %804 = vmatprep.subr.mxu0 0.0
  %v805 = vand.u32 %v26, 4294901760
  %v806 = vsub.f32 %v26, %v805
  %807 = vmatpush1.msra.mxu0 %v806
  %808 = vmatprep.subr.mxu0 0.0
  %v809 = vand.u32 %v29, 4294901760
  %v810 = vsub.f32 %v29, %v809
  %811 = vmatpush1.msra.mxu0 %v810
  %812 = vmatprep.subr.mxu0 0.0
  %v813 = vand.u32 %v32, 4294901760
  %v814 = vsub.f32 %v32, %v813
  %815 = vmatpush1.msra.mxu0 %v814
  %816 = vmatprep.subr.mxu0 0.0
  %v817 = vand.u32 %v35, 4294901760
  %v818 = vsub.f32 %v35, %v817
  %819 = vmatpush1.msra.mxu0 %v818
  %820 = vmatprep.subr.mxu0 0.0
  %v821 = vand.u32 %v57, 4294901760
  %v822 = vsub.f32 %v57, %v821
  %823 = vmatpush1.msra.mxu0 %v822
  %824 = vmatprep.subr.mxu0 0.0
  %825 = vmatpush1.msra.mxu0 0.0
  %826 = vmatprep.subr.mxu0 0.0
  %827 = vmatpush1.msra.mxu0 0.0
  %828 = vmatprep.subr.mxu0 0.0
  %829 = vmatpush1.msra.mxu0 0.0
  %830 = vmatprep.subr.mxu0 0.0
  %831 = vmatpush1.msra.mxu0 0.0
  %832 = vmatprep.subr.mxu0 0.0
  %833 = vmatpush1.msra.mxu0 0.0
  %834 = vmatprep.subr.mxu0 0.0
  %835 = vmatpush1.msra.mxu0 0.0
  %836 = vmatprep.subr.mxu0 0.0
  %837 = vmatpush1.msra.mxu0 0.0
  %838 = vmatprep.subr.mxu0 0.0
  %839 = vmatpush1.msra.mxu0 0.0
  %840 = vmatprep.subr.mxu0 0.0
  %841 = vmatpush1.msra.mxu0 0.0
  %842 = vmatprep.subr.mxu0 0.0
  %843 = vmatpush1.msra.mxu0 0.0
  %844 = vmatprep.subr.mxu0 0.0
  %845 = vmatpush1.msra.mxu0 0.0
  %846 = vmatprep.subr.mxu0 0.0
  %847 = vmatpush1.msra.mxu0 0.0
  %848 = vmatprep.subr.mxu0 0.0
  %849 = vmatpush1.msra.mxu0 0.0
  %850 = vmatprep.subr.mxu0 0.0
  %851 = vmatpush1.msra.mxu0 0.0
  %852 = vmatprep.subr.mxu0 0.0
  %853 = vmatpush1.msra.mxu0 0.0
  %854 = vmatprep.subr.mxu0 0.0
  %855 = vmatpush1.msra.mxu0 0.0
  %856 = vmatprep.subr.mxu0 0.0
  %857 = vmatpush1.msra.mxu0 0.0
  %858 = vmatprep.subr.mxu0 0.0
  %859 = vmatpush1.msra.mxu0 0.0
  %860 = vmatprep.subr.mxu0 0.0
  %861 = vmatpush1.msra.mxu0 0.0
  %862 = vmatprep.subr.mxu0 0.0
  %863 = vmatpush1.msra.mxu0 0.0
  %864 = vmatprep.subr.mxu0 0.0
  %865 = vmatpush1.msra.mxu0 0.0
  %866 = vmatprep.subr.mxu0 0.0
  %867 = vmatpush1.msra.mxu0 0.0
  %868 = vmatprep.subr.mxu0 0.0
  %869 = vmatpush1.msra.mxu0 0.0
  %870 = vmatprep.subr.mxu0 0.0
  %871 = vmatpush1.msra.mxu0 0.0
  %872 = vmatprep.subr.mxu0 0.0
  %873 = vmatpush1.msra.mxu0 0.0
  %874 = vmatprep.subr.mxu0 0.0
  %875 = vmatpush1.msra.mxu0 0.0
  %876 = vmatprep.subr.mxu0 0.0
  %877 = vmatpush1.msra.mxu0 0.0
  %878 = vmatprep.mubr.f32.mxu0 0.0
  %v879 = vand.u32 %v47, 4294901760
  %v880 = vsub.f32 %v47, %v879
  %881 = vmatmul.mubr.f32.gmra.mrb[0].mxu0 %v880
  %v882 = vpop.f32.mrb[0].mxu0
  %v883 = vadd.f32 %v801, %v882
  %v884 = vpop.f32.mrb[0].mxu0
  %885 = vdwg.mxu0
  %886 = vmatprep.subr.mxu0 0.0
  %v887 = vand.u32 %v26, 4294901760
  %888 = vmatpush1.msra.mxu0 %v887
  %889 = vmatprep.subr.mxu0 0.0
  %v890 = vand.u32 %v29, 4294901760
  %891 = vmatpush1.msra.mxu0 %v890
  %892 = vmatprep.subr.mxu0 0.0
  %v893 = vand.u32 %v32, 4294901760
  %894 = vmatpush1.msra.mxu0 %v893
  %895 = vmatprep.subr.mxu0 0.0
  %v896 = vand.u32 %v35, 4294901760
  %897 = vmatpush1.msra.mxu0 %v896
  %898 = vmatprep.subr.mxu0 0.0
  %v899 = vand.u32 %v57, 4294901760
  %900 = vmatpush1.msra.mxu0 %v899
  %901 = vmatprep.subr.mxu0 0.0
  %902 = vmatpush1.msra.mxu0 0.0
  %903 = vmatprep.subr.mxu0 0.0
  %904 = vmatpush1.msra.mxu0 0.0
  %905 = vmatprep.subr.mxu0 0.0
  %906 = vmatpush1.msra.mxu0 0.0
  %907 = vmatprep.subr.mxu0 0.0
  %908 = vmatpush1.msra.mxu0 0.0
  %909 = vmatprep.subr.mxu0 0.0
  %910 = vmatpush1.msra.mxu0 0.0
  %911 = vmatprep.subr.mxu0 0.0
  %912 = vmatpush1.msra.mxu0 0.0
  %913 = vmatprep.subr.mxu0 0.0
  %914 = vmatpush1.msra.mxu0 0.0
  %915 = vmatprep.subr.mxu0 0.0
  %916 = vmatpush1.msra.mxu0 0.0
  %917 = vmatprep.subr.mxu0 0.0
  %918 = vmatpush1.msra.mxu0 0.0
  %919 = vmatprep.subr.mxu0 0.0
  %920 = vmatpush1.msra.mxu0 0.0
  %921 = vmatprep.subr.mxu0 0.0
  %922 = vmatpush1.msra.mxu0 0.0
  %923 = vmatprep.subr.mxu0 0.0
  %924 = vmatpush1.msra.mxu0 0.0
  %925 = vmatprep.subr.mxu0 0.0
  %926 = vmatpush1.msra.mxu0 0.0
  %927 = vmatprep.subr.mxu0 0.0
  %928 = vmatpush1.msra.mxu0 0.0
  %929 = vmatprep.subr.mxu0 0.0
  %930 = vmatpush1.msra.mxu0 0.0
  %931 = vmatprep.subr.mxu0 0.0
  %932 = vmatpush1.msra.mxu0 0.0
  %933 = vmatprep.subr.mxu0 0.0
  %934 = vmatpush1.msra.mxu0 0.0
  %935 = vmatprep.subr.mxu0 0.0
  %936 = vmatpush1.msra.mxu0 0.0
  %937 = vmatprep.subr.mxu0 0.0
  %938 = vmatpush1.msra.mxu0 0.0
  %939 = vmatprep.subr.mxu0 0.0
  %940 = vmatpush1.msra.mxu0 0.0
  %941 = vmatprep.subr.mxu0 0.0
  %942 = vmatpush1.msra.mxu0 0.0
  %943 = vmatprep.subr.mxu0 0.0
  %944 = vmatpush1.msra.mxu0 0.0
  %945 = vmatprep.subr.mxu0 0.0
  %946 = vmatpush1.msra.mxu0 0.0
  %947 = vmatprep.subr.mxu0 0.0
  %948 = vmatpush1.msra.mxu0 0.0
  %949 = vmatprep.subr.mxu0 0.0
  %950 = vmatpush1.msra.mxu0 0.0
  %951 = vmatprep.subr.mxu0 0.0
  %952 = vmatpush1.msra.mxu0 0.0
  %953 = vmatprep.subr.mxu0 0.0
  %954 = vmatpush1.msra.mxu0 0.0
  %955 = vmatprep.mubr.f32.mxu0 0.0
  %v956 = vand.u32 %v47, 4294901760
  %v957 = vsub.f32 %v47, %v956
  %v958 = vand.u32 %v957, 4294901760
  %959 = vmatmul.mubr.f32.gmra.mrb[0].mxu0 %v958
  %v960 = vpop.f32.mrb[0].mxu0
  %v961 = vadd.f32 %v883, %v960
  %v962 = vpop.f32.mrb[0].mxu0
  %963 = vdwg.mxu0
  %964 = vmatprep.subr.mxu0 0.0
  %v965 = vand.u32 %v26, 4294901760
  %v966 = vsub.f32 %v26, %v965
  %v967 = vand.u32 %v966, 4294901760
  %968 = vmatpush1.msra.mxu0 %v967
  %969 = vmatprep.subr.mxu0 0.0
  %v970 = vand.u32 %v29, 4294901760
  %v971 = vsub.f32 %v29, %v970
  %v972 = vand.u32 %v971, 4294901760
  %973 = vmatpush1.msra.mxu0 %v972
  %974 = vmatprep.subr.mxu0 0.0
  %v975 = vand.u32 %v32, 4294901760
  %v976 = vsub.f32 %v32, %v975
  %v977 = vand.u32 %v976, 4294901760
  %978 = vmatpush1.msra.mxu0 %v977
  %979 = vmatprep.subr.mxu0 0.0
  %v980 = vand.u32 %v35, 4294901760
  %v981 = vsub.f32 %v35, %v980
  %v982 = vand.u32 %v981, 4294901760
  %983 = vmatpush1.msra.mxu0 %v982
  %984 = vmatprep.subr.mxu0 0.0
  %v985 = vand.u32 %v57, 4294901760
  %v986 = vsub.f32 %v57, %v985
  %v987 = vand.u32 %v986, 4294901760
  %988 = vmatpush1.msra.mxu0 %v987
  %989 = vmatprep.subr.mxu0 0.0
  %990 = vmatpush1.msra.mxu0 0.0
  %991 = vmatprep.subr.mxu0 0.0
  %992 = vmatpush1.msra.mxu0 0.0
  %993 = vmatprep.subr.mxu0 0.0
  %994 = vmatpush1.msra.mxu0 0.0
  %995 = vmatprep.subr.mxu0 0.0
  %996 = vmatpush1.msra.mxu0 0.0
  %997 = vmatprep.subr.mxu0 0.0
  %998 = vmatpush1.msra.mxu0 0.0
  %999 = vmatprep.subr.mxu0 0.0
  %1000 = vmatpush1.msra.mxu0 0.0
  %1001 = vmatprep.subr.mxu0 0.0
  %1002 = vmatpush1.msra.mxu0 0.0
  %1003 = vmatprep.subr.mxu0 0.0
  %1004 = vmatpush1.msra.mxu0 0.0
  %1005 = vmatprep.subr.mxu0 0.0
  %1006 = vmatpush1.msra.mxu0 0.0
  %1007 = vmatprep.subr.mxu0 0.0
  %1008 = vmatpush1.msra.mxu0 0.0
  %1009 = vmatprep.subr.mxu0 0.0
  %1010 = vmatpush1.msra.mxu0 0.0
  %1011 = vmatprep.subr.mxu0 0.0
  %1012 = vmatpush1.msra.mxu0 0.0
  %1013 = vmatprep.subr.mxu0 0.0
  %1014 = vmatpush1.msra.mxu0 0.0
  %1015 = vmatprep.subr.mxu0 0.0
  %1016 = vmatpush1.msra.mxu0 0.0
  %1017 = vmatprep.subr.mxu0 0.0
  %1018 = vmatpush1.msra.mxu0 0.0
  %1019 = vmatprep.subr.mxu0 0.0
  %1020 = vmatpush1.msra.mxu0 0.0
  %1021 = vmatprep.subr.mxu0 0.0
  %1022 = vmatpush1.msra.mxu0 0.0
  %1023 = vmatprep.subr.mxu0 0.0
  %1024 = vmatpush1.msra.mxu0 0.0
  %1025 = vmatprep.subr.mxu0 0.0
  %1026 = vmatpush1.msra.mxu0 0.0
  %1027 = vmatprep.subr.mxu0 0.0
  %1028 = vmatpush1.msra.mxu0 0.0
  %1029 = vmatprep.subr.mxu0 0.0
  %1030 = vmatpush1.msra.mxu0 0.0
  %1031 = vmatprep.subr.mxu0 0.0
  %1032 = vmatpush1.msra.mxu0 0.0
  %1033 = vmatprep.subr.mxu0 0.0
  %1034 = vmatpush1.msra.mxu0 0.0
  %1035 = vmatprep.subr.mxu0 0.0
  %1036 = vmatpush1.msra.mxu0 0.0
  %1037 = vmatprep.subr.mxu0 0.0
  %1038 = vmatpush1.msra.mxu0 0.0
  %1039 = vmatprep.subr.mxu0 0.0
  %1040 = vmatpush1.msra.mxu0 0.0
  %1041 = vmatprep.subr.mxu0 0.0
  %1042 = vmatpush1.msra.mxu0 0.0
  %1043 = vmatprep.mubr.f32.mxu0 0.0
  %v1044 = vand.u32 %v47, 4294901760
  %1045 = vmatmul.mubr.f32.gmra.mrb[0].mxu0 %v1044
  %v1046 = vpop.f32.mrb[0].mxu0
  %v1047 = vadd.f32 %v961, %v1046
  %v1048 = vpop.f32.mrb[0].mxu0
  %1049 = vdwg.mxu0
  %1050 = vmatprep.subr.mxu0 0.0
  %v1051 = vand.u32 %v26, 4294901760
  %1052 = vmatpush1.msra.mxu0 %v1051
  %1053 = vmatprep.subr.mxu0 0.0
  %v1054 = vand.u32 %v29, 4294901760
  %1055 = vmatpush1.msra.mxu0 %v1054
  %1056 = vmatprep.subr.mxu0 0.0
  %v1057 = vand.u32 %v32, 4294901760
  %1058 = vmatpush1.msra.mxu0 %v1057
  %1059 = vmatprep.subr.mxu0 0.0
  %v1060 = vand.u32 %v35, 4294901760
  %1061 = vmatpush1.msra.mxu0 %v1060
  %1062 = vmatprep.subr.mxu0 0.0
  %v1063 = vand.u32 %v57, 4294901760
  %1064 = vmatpush1.msra.mxu0 %v1063
  %1065 = vmatprep.subr.mxu0 0.0
  %1066 = vmatpush1.msra.mxu0 0.0
  %1067 = vmatprep.subr.mxu0 0.0
  %1068 = vmatpush1.msra.mxu0 0.0
  %1069 = vmatprep.subr.mxu0 0.0
  %1070 = vmatpush1.msra.mxu0 0.0
  %1071 = vmatprep.subr.mxu0 0.0
  %1072 = vmatpush1.msra.mxu0 0.0
  %1073 = vmatprep.subr.mxu0 0.0
  %1074 = vmatpush1.msra.mxu0 0.0
  %1075 = vmatprep.subr.mxu0 0.0
  %1076 = vmatpush1.msra.mxu0 0.0
  %1077 = vmatprep.subr.mxu0 0.0
  %1078 = vmatpush1.msra.mxu0 0.0
  %1079 = vmatprep.subr.mxu0 0.0
  %1080 = vmatpush1.msra.mxu0 0.0
  %1081 = vmatprep.subr.mxu0 0.0
  %1082 = vmatpush1.msra.mxu0 0.0
  %1083 = vmatprep.subr.mxu0 0.0
  %1084 = vmatpush1.msra.mxu0 0.0
  %1085 = vmatprep.subr.mxu0 0.0
  %1086 = vmatpush1.msra.mxu0 0.0
  %1087 = vmatprep.subr.mxu0 0.0
  %1088 = vmatpush1.msra.mxu0 0.0
  %1089 = vmatprep.subr.mxu0 0.0
  %1090 = vmatpush1.msra.mxu0 0.0
  %1091 = vmatprep.subr.mxu0 0.0
  %1092 = vmatpush1.msra.mxu0 0.0
  %1093 = vmatprep.subr.mxu0 0.0
  %1094 = vmatpush1.msra.mxu0 0.0
  %1095 = vmatprep.subr.mxu0 0.0
  %1096 = vmatpush1.msra.mxu0 0.0
  %1097 = vmatprep.subr.mxu0 0.0
  %1098 = vmatpush1.msra.mxu0 0.0
  %1099 = vmatprep.subr.mxu0 0.0
  %1100 = vmatpush1.msra.mxu0 0.0
  %1101 = vmatprep.subr.mxu0 0.0
  %1102 = vmatpush1.msra.mxu0 0.0
  %1103 = vmatprep.subr.mxu0 0.0
  %1104 = vmatpush1.msra.mxu0 0.0
  %1105 = vmatprep.subr.mxu0 0.0
  %1106 = vmatpush1.msra.mxu0 0.0
  %1107 = vmatprep.subr.mxu0 0.0
  %1108 = vmatpush1.msra.mxu0 0.0
  %1109 = vmatprep.subr.mxu0 0.0
  %1110 = vmatpush1.msra.mxu0 0.0
  %1111 = vmatprep.subr.mxu0 0.0
  %1112 = vmatpush1.msra.mxu0 0.0
  %1113 = vmatprep.subr.mxu0 0.0
  %1114 = vmatpush1.msra.mxu0 0.0
  %1115 = vmatprep.subr.mxu0 0.0
  %1116 = vmatpush1.msra.mxu0 0.0
  %1117 = vmatprep.subr.mxu0 0.0
  %1118 = vmatpush1.msra.mxu0 0.0
  %1119 = vmatprep.mubr.f32.mxu0 0.0
  %v1120 = vand.u32 %v47, 4294901760
  %1121 = vmatmul.mubr.f32.gmra.mrb[0].mxu0 %v1120
  %v1122 = vpop.f32.mrb[0].mxu0
  %v1123 = vadd.f32 %v1047, %v1122
  %v1124 = vpop.f32.mrb[0].mxu0
  %1125 = vdwg.mxu0
  %v1126 = vmax.f32 %v624, 0.0
  %v1127 = vmax.f32 %v626, 0.0
  %v1128 = vmax.f32 %v1123, 0.0
  %v1129 = vmul.f32 %v1126, 0.99999
  %v1130 = vmul.f32 %v1127, 0.99999
  %v1131 = vmul.f32 %v1128, 0.99999
  %v1132 = vld [vmem:[%s5] sm:$0x7]
  %v1134 = vlaneseq
  %v1135 = vshrl.u32 %v1134, 7
  %v1136 = vsub.s32 0, %v1135
  %v1137 = vrot.slane %v1132, %v1136
  %v1138 = vlaneseq
  %v1139 = vshrl.u32 %v1138, 7
  %v1140 = vsub.s32 1, %v1139
  %v1141 = vrot.slane %v1132, %v1140
  %v1142 = vlaneseq
  %v1143 = vshrl.u32 %v1142, 7
  %v1144 = vsub.s32 2, %v1143
  %v1145 = vrot.slane %v1132, %v1144
  %v1149 = vmul.f32 %v1129, %v1137
  %v1150 = vmul.f32 %v1130, %v1141
  %v1151 = vmul.f32 %v1131, %v1145
  %1152 = vst [vmem:[#allocation2] sm:$0xff] %v1149
  %1153 = vst [vmem:[#allocation2 + $0x8] sm:$0xff] %v1150
  %1157 = vrot.lane.b32.xlu0 %v1149, 127
  %v1158 = vpop.permute.xlu0 %1157
  %1159 = vrot.lane.b32.xlu0 %v1150, 127
  %v1160 = vpop.permute.xlu0 %1159
  %1161 = vrot.lane.b32.xlu0 %v1151, 127
  %v1162 = vpop.permute.xlu0 %1161
  %vm1163 = vcmask 1039360
  %v1164 = vsel %vm1163, %v1158, %v1160
  %v1165 = vsel %vm1163, %v1160, %v1162
  %1168 = vst [vmem:[#allocation2 + $0x10] sm:$0xff] %v1164
  %1169 = vst [vmem:[#allocation2 + $0x18] sm:$0xff] %v1165
  %1170 = vrot.lane.b32.xlu0 %v1149, 126
  %v1171 = vpop.permute.xlu0 %1170
  %1172 = vrot.lane.b32.xlu0 %v1150, 126
  %v1173 = vpop.permute.xlu0 %1172
  %1174 = vrot.lane.b32.xlu0 %v1151, 126
  %v1175 = vpop.permute.xlu0 %1174
  %vm1176 = vcmask 1031168
  %v1177 = vsel %vm1176, %v1171, %v1173
  %v1178 = vsel %vm1176, %v1173, %v1175
  %1181 = vst [vmem:[#allocation2 + $0x20] sm:$0xff] %v1177
  %1182 = vst [vmem:[#allocation2 + $0x28] sm:$0xff] %v1178
  %1183 = vrot.lane.b32.xlu0 %v1149, 118
  %v1184 = vpop.permute.xlu0 %1183
  %1185 = vrot.lane.b32.xlu0 %v1150, 118
  %v1186 = vpop.permute.xlu0 %1185
  %1187 = vrot.lane.b32.xlu0 %v1151, 118
  %v1188 = vpop.permute.xlu0 %1187
  %vm1189 = vcmask 965632
  %v1190 = vsel %vm1189, %v1184, %v1186
  %v1191 = vsel %vm1189, %v1186, %v1188
  %1194 = vst [vmem:[#allocation2 + $0x30] sm:$0xff] %v1190
  %1195 = vst [vmem:[#allocation2 + $0x38] sm:$0xff] %v1191
  %1196 = vrot.lane.b32.xlu0 %v1149, 117
  %v1197 = vpop.permute.xlu0 %1196
  %1198 = vrot.lane.b32.xlu0 %v1150, 117
  %v1199 = vpop.permute.xlu0 %1198
  %1200 = vrot.lane.b32.xlu0 %v1151, 117
  %v1201 = vpop.permute.xlu0 %1200
  %vm1202 = vcmask 957440
  %v1203 = vsel %vm1202, %v1197, %v1199
  %v1204 = vsel %vm1202, %v1199, %v1201
  %1207 = vst [vmem:[#allocation2 + $0x40] sm:$0xff] %v1203
  %1208 = vst [vmem:[#allocation2 + $0x48] sm:$0xff] %v1204
  %1209 = vrot.lane.b32.xlu0 %v1149, 116
  %v1210 = vpop.permute.xlu0 %1209
  %1211 = vrot.lane.b32.xlu0 %v1150, 116
  %v1212 = vpop.permute.xlu0 %1211
  %1213 = vrot.lane.b32.xlu0 %v1151, 116
  %v1214 = vpop.permute.xlu0 %1213
  %vm1215 = vcmask 949248
  %v1216 = vsel %vm1215, %v1210, %v1212
  %v1217 = vsel %vm1215, %v1212, %v1214
  %1220 = vst [vmem:[#allocation2 + $0x50] sm:$0xff] %v1216
  %1221 = vst [vmem:[#allocation2 + $0x58] sm:$0xff] %v1217
  %1222 = vrot.lane.b32.xlu0 %v1149, 108
  %v1223 = vpop.permute.xlu0 %1222
  %1224 = vrot.lane.b32.xlu0 %v1150, 108
  %v1225 = vpop.permute.xlu0 %1224
  %1226 = vrot.lane.b32.xlu0 %v1151, 108
  %v1227 = vpop.permute.xlu0 %1226
  %vm1228 = vcmask 883712
  %v1229 = vsel %vm1228, %v1223, %v1225
  %v1230 = vsel %vm1228, %v1225, %v1227
  %1233 = vst [vmem:[#allocation2 + $0x60] sm:$0xff] %v1229
  %1234 = vst [vmem:[#allocation2 + $0x68] sm:$0xff] %v1230
  %1235 = vrot.lane.b32.xlu0 %v1149, 107
  %v1236 = vpop.permute.xlu0 %1235
  %1237 = vrot.lane.b32.xlu0 %v1150, 107
  %v1238 = vpop.permute.xlu0 %1237
  %1239 = vrot.lane.b32.xlu0 %v1151, 107
  %v1240 = vpop.permute.xlu0 %1239
  %vm1241 = vcmask 875520
  %v1242 = vsel %vm1241, %v1236, %v1238
  %v1243 = vsel %vm1241, %v1238, %v1240
  %1246 = vst [vmem:[#allocation2 + $0x70] sm:$0xff] %v1242
  %1247 = vst [vmem:[#allocation2 + $0x78] sm:$0xff] %v1243
  %1248 = vrot.lane.b32.xlu0 %v1149, 106
  %v1249 = vpop.permute.xlu0 %1248
  %1250 = vrot.lane.b32.xlu0 %v1150, 106
  %v1251 = vpop.permute.xlu0 %1250
  %1252 = vrot.lane.b32.xlu0 %v1151, 106
  %v1253 = vpop.permute.xlu0 %1252
  %vm1254 = vcmask 867328
  %v1255 = vsel %vm1254, %v1249, %v1251
  %v1256 = vsel %vm1254, %v1251, %v1253
  %1259 = vst [vmem:[#allocation2 + $0x80] sm:$0xff] %v1255
  %1260 = vst [vmem:[#allocation2 + $0x88] sm:$0xff] %v1256
  %v1261 = vld [vmem:[%s3] sm:$0xff]
  %v1262 = vld [vmem:[#allocation2] sm:$0xff]
  %v1263 = vld [vmem:[#allocation2 + $0x8] sm:$0xff]
  %v1264 = vld [vmem:[#allocation2 + $0x10] sm:$0xff]
  %v1265 = vld [vmem:[#allocation2 + $0x18] sm:$0xff]
  %v1266 = vld [vmem:[#allocation2 + $0x20] sm:$0xff]
  %v1267 = vld [vmem:[#allocation2 + $0x28] sm:$0xff]
  %v1268 = vld [vmem:[#allocation2 + $0x30] sm:$0xff]
  %v1269 = vld [vmem:[#allocation2 + $0x38] sm:$0xff]
  %v1270 = vld [vmem:[#allocation2 + $0x40] sm:$0xff]
  %v1271 = vld [vmem:[#allocation2 + $0x48] sm:$0xff]
  %v1272 = vld [vmem:[#allocation2 + $0x50] sm:$0xff]
  %v1273 = vld [vmem:[#allocation2 + $0x58] sm:$0xff]
  %v1274 = vld [vmem:[#allocation2 + $0x60] sm:$0xff]
  %v1275 = vld [vmem:[#allocation2 + $0x68] sm:$0xff]
  %v1276 = vld [vmem:[#allocation2 + $0x70] sm:$0xff]
  %v1277 = vld [vmem:[#allocation2 + $0x78] sm:$0xff]
  %v1278 = vld [vmem:[#allocation2 + $0x80] sm:$0xff]
  %v1279 = vld [vmem:[#allocation2 + $0x88] sm:$0xff]
  %v1280 = vld [vmem:[%s4] sm:$0xff]
  %1282 = vset.pattern.permute.xlu0 0
  %1283 = vperm.xlu0 %1282, %v1280
  %v1284 = vpop.permute.xlu0 %1283
  %vm1286 = vcmask 588800
  %v1288 = vsel %vm1286, %v1261, 0
  %v1290 = vand.u32 %v1263, 4294901760
  %1291 = vmatprep.subr.mxu0 %v1290
  %v1292 = vand.u32 %v1262, 4294901760
  %1293 = vmatpush1.msra.mxu0 %v1292
  %v1294 = vand.u32 %v1265, 4294901760
  %1295 = vmatprep.subr.mxu0 %v1294
  %v1296 = vand.u32 %v1264, 4294901760
  %1297 = vmatpush1.msra.mxu0 %v1296
  %v1298 = vand.u32 %v1267, 4294901760
  %1299 = vmatprep.subr.mxu0 %v1298
  %v1300 = vand.u32 %v1266, 4294901760
  %1301 = vmatpush1.msra.mxu0 %v1300
  %v1302 = vand.u32 %v1269, 4294901760
  %1303 = vmatprep.subr.mxu0 %v1302
  %v1304 = vand.u32 %v1268, 4294901760
  %1305 = vmatpush1.msra.mxu0 %v1304
  %v1306 = vand.u32 %v1271, 4294901760
  %1307 = vmatprep.subr.mxu0 %v1306
  %v1308 = vand.u32 %v1270, 4294901760
  %1309 = vmatpush1.msra.mxu0 %v1308
  %v1310 = vand.u32 %v1273, 4294901760
  %1311 = vmatprep.subr.mxu0 %v1310
  %v1312 = vand.u32 %v1272, 4294901760
  %1313 = vmatpush1.msra.mxu0 %v1312
  %v1314 = vand.u32 %v1275, 4294901760
  %1315 = vmatprep.subr.mxu0 %v1314
  %v1316 = vand.u32 %v1274, 4294901760
  %1317 = vmatpush1.msra.mxu0 %v1316
  %v1318 = vand.u32 %v1277, 4294901760
  %1319 = vmatprep.subr.mxu0 %v1318
  %v1320 = vand.u32 %v1276, 4294901760
  %1321 = vmatpush1.msra.mxu0 %v1320
  %v1322 = vand.u32 %v1279, 4294901760
  %1323 = vmatprep.subr.mxu0 %v1322
  %v1324 = vand.u32 %v1278, 4294901760
  %1325 = vmatpush1.msra.mxu0 %v1324
  %1326 = vmatprep.subr.mxu0 0.0
  %1327 = vmatpush1.msra.mxu0 0.0
  %1328 = vmatprep.subr.mxu0 0.0
  %1329 = vmatpush1.msra.mxu0 0.0
  %1330 = vmatprep.subr.mxu0 0.0
  %1331 = vmatpush1.msra.mxu0 0.0
  %1332 = vmatprep.subr.mxu0 0.0
  %1333 = vmatpush1.msra.mxu0 0.0
  %1334 = vmatprep.subr.mxu0 0.0
  %1335 = vmatpush1.msra.mxu0 0.0
  %1336 = vmatprep.subr.mxu0 0.0
  %1337 = vmatpush1.msra.mxu0 0.0
  %1338 = vmatprep.subr.mxu0 0.0
  %1339 = vmatpush1.msra.mxu0 0.0
  %1340 = vmatprep.subr.mxu0 0.0
  %1341 = vmatpush1.msra.mxu0 0.0
  %1342 = vmatprep.subr.mxu0 0.0
  %1343 = vmatpush1.msra.mxu0 0.0
  %1344 = vmatprep.subr.mxu0 0.0
  %1345 = vmatpush1.msra.mxu0 0.0
  %1346 = vmatprep.subr.mxu0 0.0
  %1347 = vmatpush1.msra.mxu0 0.0
  %1348 = vmatprep.subr.mxu0 0.0
  %1349 = vmatpush1.msra.mxu0 0.0
  %1350 = vmatprep.subr.mxu0 0.0
  %1351 = vmatpush1.msra.mxu0 0.0
  %1352 = vmatprep.subr.mxu0 0.0
  %1353 = vmatpush1.msra.mxu0 0.0
  %1354 = vmatprep.subr.mxu0 0.0
  %1355 = vmatpush1.msra.mxu0 0.0
  %1356 = vmatprep.subr.mxu0 0.0
  %1357 = vmatpush1.msra.mxu0 0.0
  %1358 = vmatprep.subr.mxu0 0.0
  %1359 = vmatpush1.msra.mxu0 0.0
  %1360 = vmatprep.subr.mxu0 0.0
  %1361 = vmatpush1.msra.mxu0 0.0
  %1362 = vmatprep.subr.mxu0 0.0
  %1363 = vmatpush1.msra.mxu0 0.0
  %1364 = vmatprep.subr.mxu0 0.0
  %1365 = vmatpush1.msra.mxu0 0.0
  %1366 = vmatprep.subr.mxu0 0.0
  %1367 = vmatpush1.msra.mxu0 0.0
  %1368 = vmatprep.subr.mxu0 0.0
  %1369 = vmatpush1.msra.mxu0 0.0
  %1370 = vmatprep.subr.mxu0 0.0
  %1371 = vmatpush1.msra.mxu0 0.0
  %1372 = vmatprep.mubr.f32.mxu0 0.0
  %v1373 = vand.u32 %v1288, 4294901760
  %v1374 = vsub.f32 %v1288, %v1373
  %v1375 = vand.u32 %v1374, 4294901760
  %v1376 = vsub.f32 %v1374, %v1375
  %v1377 = vand.u32 %v1376, 4294901760
  %1378 = vmatmul.mubr.f32.gmra.mrb[0].mxu0 %v1377
  %v1379 = vpop.f32.mrb[0].mxu0
  %v1380 = vadd.f32 %v1284, %v1379
  %v1381 = vpop.f32.mrb[0].mxu0
  %v1382 = vadd.f32 %v1284, %v1381
  %1383 = vdwg.mxu0
  %v1384 = vand.u32 %v1263, 4294901760
  %v1385 = vsub.f32 %v1263, %v1384
  %v1386 = vand.u32 %v1385, 4294901760
  %v1387 = vsub.f32 %v1385, %v1386
  %v1388 = vand.u32 %v1387, 4294901760
  %1389 = vmatprep.subr.mxu0 %v1388
  %v1390 = vand.u32 %v1262, 4294901760
  %v1391 = vsub.f32 %v1262, %v1390
  %v1392 = vand.u32 %v1391, 4294901760
  %v1393 = vsub.f32 %v1391, %v1392
  %v1394 = vand.u32 %v1393, 4294901760
  %1395 = vmatpush1.msra.mxu0 %v1394
  %v1396 = vand.u32 %v1265, 4294901760
  %v1397 = vsub.f32 %v1265, %v1396
  %v1398 = vand.u32 %v1397, 4294901760
  %v1399 = vsub.f32 %v1397, %v1398
  %v1400 = vand.u32 %v1399, 4294901760
  %1401 = vmatprep.subr.mxu0 %v1400
  %v1402 = vand.u32 %v1264, 4294901760
  %v1403 = vsub.f32 %v1264, %v1402
  %v1404 = vand.u32 %v1403, 4294901760
  %v1405 = vsub.f32 %v1403, %v1404
  %v1406 = vand.u32 %v1405, 4294901760
  %1407 = vmatpush1.msra.mxu0 %v1406
  %v1408 = vand.u32 %v1267, 4294901760
  %v1409 = vsub.f32 %v1267, %v1408
  %v1410 = vand.u32 %v1409, 4294901760
  %v1411 = vsub.f32 %v1409, %v1410
  %v1412 = vand.u32 %v1411, 4294901760
  %1413 = vmatprep.subr.mxu0 %v1412
  %v1414 = vand.u32 %v1266, 4294901760
  %v1415 = vsub.f32 %v1266, %v1414
  %v1416 = vand.u32 %v1415, 4294901760
  %v1417 = vsub.f32 %v1415, %v1416
  %v1418 = vand.u32 %v1417, 4294901760
  %1419 = vmatpush1.msra.mxu0 %v1418
  %v1420 = vand.u32 %v1269, 4294901760
  %v1421 = vsub.f32 %v1269, %v1420
  %v1422 = vand.u32 %v1421, 4294901760
  %v1423 = vsub.f32 %v1421, %v1422
  %v1424 = vand.u32 %v1423, 4294901760
  %1425 = vmatprep.subr.mxu0 %v1424
  %v1426 = vand.u32 %v1268, 4294901760
  %v1427 = vsub.f32 %v1268, %v1426
  %v1428 = vand.u32 %v1427, 4294901760
  %v1429 = vsub.f32 %v1427, %v1428
  %v1430 = vand.u32 %v1429, 4294901760
  %1431 = vmatpush1.msra.mxu0 %v1430
  %v1432 = vand.u32 %v1271, 4294901760
  %v1433 = vsub.f32 %v1271, %v1432
  %v1434 = vand.u32 %v1433, 4294901760
  %v1435 = vsub.f32 %v1433, %v1434
  %v1436 = vand.u32 %v1435, 4294901760
  %1437 = vmatprep.subr.mxu0 %v1436
  %v1438 = vand.u32 %v1270, 4294901760
  %v1439 = vsub.f32 %v1270, %v1438
  %v1440 = vand.u32 %v1439, 4294901760
  %v1441 = vsub.f32 %v1439, %v1440
  %v1442 = vand.u32 %v1441, 4294901760
  %1443 = vmatpush1.msra.mxu0 %v1442
  %v1444 = vand.u32 %v1273, 4294901760
  %v1445 = vsub.f32 %v1273, %v1444
  %v1446 = vand.u32 %v1445, 4294901760
  %v1447 = vsub.f32 %v1445, %v1446
  %v1448 = vand.u32 %v1447, 4294901760
  %1449 = vmatprep.subr.mxu0 %v1448
  %v1450 = vand.u32 %v1272, 4294901760
  %v1451 = vsub.f32 %v1272, %v1450
  %v1452 = vand.u32 %v1451, 4294901760
  %v1453 = vsub.f32 %v1451, %v1452
  %v1454 = vand.u32 %v1453, 4294901760
  %1455 = vmatpush1.msra.mxu0 %v1454
  %v1456 = vand.u32 %v1275, 4294901760
  %v1457 = vsub.f32 %v1275, %v1456
  %v1458 = vand.u32 %v1457, 4294901760
  %v1459 = vsub.f32 %v1457, %v1458
  %v1460 = vand.u32 %v1459, 4294901760
  %1461 = vmatprep.subr.mxu0 %v1460
  %v1462 = vand.u32 %v1274, 4294901760
  %v1463 = vsub.f32 %v1274, %v1462
  %v1464 = vand.u32 %v1463, 4294901760
  %v1465 = vsub.f32 %v1463, %v1464
  %v1466 = vand.u32 %v1465, 4294901760
  %1467 = vmatpush1.msra.mxu0 %v1466
  %v1468 = vand.u32 %v1277, 4294901760
  %v1469 = vsub.f32 %v1277, %v1468
  %v1470 = vand.u32 %v1469, 4294901760
  %v1471 = vsub.f32 %v1469, %v1470
  %v1472 = vand.u32 %v1471, 4294901760
  %1473 = vmatprep.subr.mxu0 %v1472
  %v1474 = vand.u32 %v1276, 4294901760
  %v1475 = vsub.f32 %v1276, %v1474
  %v1476 = vand.u32 %v1475, 4294901760
  %v1477 = vsub.f32 %v1475, %v1476
  %v1478 = vand.u32 %v1477, 4294901760
  %1479 = vmatpush1.msra.mxu0 %v1478
  %v1480 = vand.u32 %v1279, 4294901760
  %v1481 = vsub.f32 %v1279, %v1480
  %v1482 = vand.u32 %v1481, 4294901760
  %v1483 = vsub.f32 %v1481, %v1482
  %v1484 = vand.u32 %v1483, 4294901760
  %1485 = vmatprep.subr.mxu0 %v1484
  %v1486 = vand.u32 %v1278, 4294901760
  %v1487 = vsub.f32 %v1278, %v1486
  %v1488 = vand.u32 %v1487, 4294901760
  %v1489 = vsub.f32 %v1487, %v1488
  %v1490 = vand.u32 %v1489, 4294901760
  %1491 = vmatpush1.msra.mxu0 %v1490
  %1492 = vmatprep.subr.mxu0 0.0
  %1493 = vmatpush1.msra.mxu0 0.0
  %1494 = vmatprep.subr.mxu0 0.0
  %1495 = vmatpush1.msra.mxu0 0.0
  %1496 = vmatprep.subr.mxu0 0.0
  %1497 = vmatpush1.msra.mxu0 0.0
  %1498 = vmatprep.subr.mxu0 0.0
  %1499 = vmatpush1.msra.mxu0 0.0
  %1500 = vmatprep.subr.mxu0 0.0
  %1501 = vmatpush1.msra.mxu0 0.0
  %1502 = vmatprep.subr.mxu0 0.0
  %1503 = vmatpush1.msra.mxu0 0.0
  %1504 = vmatprep.subr.mxu0 0.0
  %1505 = vmatpush1.msra.mxu0 0.0
  %1506 = vmatprep.subr.mxu0 0.0
  %1507 = vmatpush1.msra.mxu0 0.0
  %1508 = vmatprep.subr.mxu0 0.0
  %1509 = vmatpush1.msra.mxu0 0.0
  %1510 = vmatprep.subr.mxu0 0.0
  %1511 = vmatpush1.msra.mxu0 0.0
  %1512 = vmatprep.subr.mxu0 0.0
  %1513 = vmatpush1.msra.mxu0 0.0
  %1514 = vmatprep.subr.mxu0 0.0
  %1515 = vmatpush1.msra.mxu0 0.0
  %1516 = vmatprep.subr.mxu0 0.0
  %1517 = vmatpush1.msra.mxu0 0.0
  %1518 = vmatprep.subr.mxu0 0.0
  %1519 = vmatpush1.msra.mxu0 0.0
  %1520 = vmatprep.subr.mxu0 0.0
  %1521 = vmatpush1.msra.mxu0 0.0
  %1522 = vmatprep.subr.mxu0 0.0
  %1523 = vmatpush1.msra.mxu0 0.0
  %1524 = vmatprep.subr.mxu0 0.0
  %1525 = vmatpush1.msra.mxu0 0.0
  %1526 = vmatprep.subr.mxu0 0.0
  %1527 = vmatpush1.msra.mxu0 0.0
  %1528 = vmatprep.subr.mxu0 0.0
  %1529 = vmatpush1.msra.mxu0 0.0
  %1530 = vmatprep.subr.mxu0 0.0
  %1531 = vmatpush1.msra.mxu0 0.0
  %1532 = vmatprep.subr.mxu0 0.0
  %1533 = vmatpush1.msra.mxu0 0.0
  %1534 = vmatprep.subr.mxu0 0.0
  %1535 = vmatpush1.msra.mxu0 0.0
  %1536 = vmatprep.subr.mxu0 0.0
  %1537 = vmatpush1.msra.mxu0 0.0
  %1538 = vmatprep.mubr.f32.mxu0 0.0
  %v1539 = vand.u32 %v1288, 4294901760
  %1540 = vmatmul.mubr.f32.gmra.mrb[0].mxu0 %v1539
  %v1541 = vpop.f32.mrb[0].mxu0
  %v1542 = vadd.f32 %v1380, %v1541
  %v1543 = vpop.f32.mrb[0].mxu0
  %v1544 = vadd.f32 %v1382, %v1543
  %1545 = vdwg.mxu0
  %v1546 = vand.u32 %v1263, 4294901760
  %v1547 = vsub.f32 %v1263, %v1546
  %1548 = vmatprep.subr.mxu0 %v1547
  %v1549 = vand.u32 %v1262, 4294901760
  %v1550 = vsub.f32 %v1262, %v1549
  %1551 = vmatpush1.msra.mxu0 %v1550
  %v1552 = vand.u32 %v1265, 4294901760
  %v1553 = vsub.f32 %v1265, %v1552
  %1554 = vmatprep.subr.mxu0 %v1553
  %v1555 = vand.u32 %v1264, 4294901760
  %v1556 = vsub.f32 %v1264, %v1555
  %1557 = vmatpush1.msra.mxu0 %v1556
  %v1558 = vand.u32 %v1267, 4294901760
  %v1559 = vsub.f32 %v1267, %v1558
  %1560 = vmatprep.subr.mxu0 %v1559
  %v1561 = vand.u32 %v1266, 4294901760
  %v1562 = vsub.f32 %v1266, %v1561
  %1563 = vmatpush1.msra.mxu0 %v1562
  %v1564 = vand.u32 %v1269, 4294901760
  %v1565 = vsub.f32 %v1269, %v1564
  %1566 = vmatprep.subr.mxu0 %v1565
  %v1567 = vand.u32 %v1268, 4294901760
  %v1568 = vsub.f32 %v1268, %v1567
  %1569 = vmatpush1.msra.mxu0 %v1568
  %v1570 = vand.u32 %v1271, 4294901760
  %v1571 = vsub.f32 %v1271, %v1570
  %1572 = vmatprep.subr.mxu0 %v1571
  %v1573 = vand.u32 %v1270, 4294901760
  %v1574 = vsub.f32 %v1270, %v1573
  %1575 = vmatpush1.msra.mxu0 %v1574
  %v1576 = vand.u32 %v1273, 4294901760
  %v1577 = vsub.f32 %v1273, %v1576
  %1578 = vmatprep.subr.mxu0 %v1577
  %v1579 = vand.u32 %v1272, 4294901760
  %v1580 = vsub.f32 %v1272, %v1579
  %1581 = vmatpush1.msra.mxu0 %v1580
  %v1582 = vand.u32 %v1275, 4294901760
  %v1583 = vsub.f32 %v1275, %v1582
  %1584 = vmatprep.subr.mxu0 %v1583
  %v1585 = vand.u32 %v1274, 4294901760
  %v1586 = vsub.f32 %v1274, %v1585
  %1587 = vmatpush1.msra.mxu0 %v1586
  %v1588 = vand.u32 %v1277, 4294901760
  %v1589 = vsub.f32 %v1277, %v1588
  %1590 = vmatprep.subr.mxu0 %v1589
  %v1591 = vand.u32 %v1276, 4294901760
  %v1592 = vsub.f32 %v1276, %v1591
  %1593 = vmatpush1.msra.mxu0 %v1592
  %v1594 = vand.u32 %v1279, 4294901760
  %v1595 = vsub.f32 %v1279, %v1594
  %1596 = vmatprep.subr.mxu0 %v1595
  %v1597 = vand.u32 %v1278, 4294901760
  %v1598 = vsub.f32 %v1278, %v1597
  %1599 = vmatpush1.msra.mxu0 %v1598
  %1600 = vmatprep.subr.mxu0 0.0
  %1601 = vmatpush1.msra.mxu0 0.0
  %1602 = vmatprep.subr.mxu0 0.0
  %1603 = vmatpush1.msra.mxu0 0.0
  %1604 = vmatprep.subr.mxu0 0.0
  %1605 = vmatpush1.msra.mxu0 0.0
  %1606 = vmatprep.subr.mxu0 0.0
  %1607 = vmatpush1.msra.mxu0 0.0
  %1608 = vmatprep.subr.mxu0 0.0
  %1609 = vmatpush1.msra.mxu0 0.0
  %1610 = vmatprep.subr.mxu0 0.0
  %1611 = vmatpush1.msra.mxu0 0.0
  %1612 = vmatprep.subr.mxu0 0.0
  %1613 = vmatpush1.msra.mxu0 0.0
  %1614 = vmatprep.subr.mxu0 0.0
  %1615 = vmatpush1.msra.mxu0 0.0
  %1616 = vmatprep.subr.mxu0 0.0
  %1617 = vmatpush1.msra.mxu0 0.0
  %1618 = vmatprep.subr.mxu0 0.0
  %1619 = vmatpush1.msra.mxu0 0.0
  %1620 = vmatprep.subr.mxu0 0.0
  %1621 = vmatpush1.msra.mxu0 0.0
  %1622 = vmatprep.subr.mxu0 0.0
  %1623 = vmatpush1.msra.mxu0 0.0
  %1624 = vmatprep.subr.mxu0 0.0
  %1625 = vmatpush1.msra.mxu0 0.0
  %1626 = vmatprep.subr.mxu0 0.0
  %1627 = vmatpush1.msra.mxu0 0.0
  %1628 = vmatprep.subr.mxu0 0.0
  %1629 = vmatpush1.msra.mxu0 0.0
  %1630 = vmatprep.subr.mxu0 0.0
  %1631 = vmatpush1.msra.mxu0 0.0
  %1632 = vmatprep.subr.mxu0 0.0
  %1633 = vmatpush1.msra.mxu0 0.0
  %1634 = vmatprep.subr.mxu0 0.0
  %1635 = vmatpush1.msra.mxu0 0.0
  %1636 = vmatprep.subr.mxu0 0.0
  %1637 = vmatpush1.msra.mxu0 0.0
  %1638 = vmatprep.subr.mxu0 0.0
  %1639 = vmatpush1.msra.mxu0 0.0
  %1640 = vmatprep.subr.mxu0 0.0
  %1641 = vmatpush1.msra.mxu0 0.0
  %1642 = vmatprep.subr.mxu0 0.0
  %1643 = vmatpush1.msra.mxu0 0.0
  %1644 = vmatprep.subr.mxu0 0.0
  %1645 = vmatpush1.msra.mxu0 0.0
  %1646 = vmatprep.mubr.f32.mxu0 0.0
  %v1647 = vand.u32 %v1288, 4294901760
  %v1648 = vsub.f32 %v1288, %v1647
  %1649 = vmatmul.mubr.f32.gmra.mrb[0].mxu0 %v1648
  %v1650 = vpop.f32.mrb[0].mxu0
  %v1651 = vadd.f32 %v1542, %v1650
  %v1652 = vpop.f32.mrb[0].mxu0
  %v1653 = vadd.f32 %v1544, %v1652
  %1654 = vdwg.mxu0
  %v1655 = vand.u32 %v1263, 4294901760
  %1656 = vmatprep.subr.mxu0 %v1655
  %v1657 = vand.u32 %v1262, 4294901760
  %1658 = vmatpush1.msra.mxu0 %v1657
  %v1659 = vand.u32 %v1265, 4294901760
  %1660 = vmatprep.subr.mxu0 %v1659
  %v1661 = vand.u32 %v1264, 4294901760
  %1662 = vmatpush1.msra.mxu0 %v1661
  %v1663 = vand.u32 %v1267, 4294901760
  %1664 = vmatprep.subr.mxu0 %v1663
  %v1665 = vand.u32 %v1266, 4294901760
  %1666 = vmatpush1.msra.mxu0 %v1665
  %v1667 = vand.u32 %v1269, 4294901760
  %1668 = vmatprep.subr.mxu0 %v1667
  %v1669 = vand.u32 %v1268, 4294901760
  %1670 = vmatpush1.msra.mxu0 %v1669
  %v1671 = vand.u32 %v1271, 4294901760
  %1672 = vmatprep.subr.mxu0 %v1671
  %v1673 = vand.u32 %v1270, 4294901760
  %1674 = vmatpush1.msra.mxu0 %v1673
  %v1675 = vand.u32 %v1273, 4294901760
  %1676 = vmatprep.subr.mxu0 %v1675
  %v1677 = vand.u32 %v1272, 4294901760
  %1678 = vmatpush1.msra.mxu0 %v1677
  %v1679 = vand.u32 %v1275, 4294901760
  %1680 = vmatprep.subr.mxu0 %v1679
  %v1681 = vand.u32 %v1274, 4294901760
  %1682 = vmatpush1.msra.mxu0 %v1681
  %v1683 = vand.u32 %v1277, 4294901760
  %1684 = vmatprep.subr.mxu0 %v1683
  %v1685 = vand.u32 %v1276, 4294901760
  %1686 = vmatpush1.msra.mxu0 %v1685
  %v1687 = vand.u32 %v1279, 4294901760
  %1688 = vmatprep.subr.mxu0 %v1687
  %v1689 = vand.u32 %v1278, 4294901760
  %1690 = vmatpush1.msra.mxu0 %v1689
  %1691 = vmatprep.subr.mxu0 0.0
  %1692 = vmatpush1.msra.mxu0 0.0
  %1693 = vmatprep.subr.mxu0 0.0
  %1694 = vmatpush1.msra.mxu0 0.0
  %1695 = vmatprep.subr.mxu0 0.0
  %1696 = vmatpush1.msra.mxu0 0.0
  %1697 = vmatprep.subr.mxu0 0.0
  %1698 = vmatpush1.msra.mxu0 0.0
  %1699 = vmatprep.subr.mxu0 0.0
  %1700 = vmatpush1.msra.mxu0 0.0
  %1701 = vmatprep.subr.mxu0 0.0
  %1702 = vmatpush1.msra.mxu0 0.0
  %1703 = vmatprep.subr.mxu0 0.0
  %1704 = vmatpush1.msra.mxu0 0.0
  %1705 = vmatprep.subr.mxu0 0.0
  %1706 = vmatpush1.msra.mxu0 0.0
  %1707 = vmatprep.subr.mxu0 0.0
  %1708 = vmatpush1.msra.mxu0 0.0
  %1709 = vmatprep.subr.mxu0 0.0
  %1710 = vmatpush1.msra.mxu0 0.0
  %1711 = vmatprep.subr.mxu0 0.0
  %1712 = vmatpush1.msra.mxu0 0.0
  %1713 = vmatprep.subr.mxu0 0.0
  %1714 = vmatpush1.msra.mxu0 0.0
  %1715 = vmatprep.subr.mxu0 0.0
  %1716 = vmatpush1.msra.mxu0 0.0
  %1717 = vmatprep.subr.mxu0 0.0
  %1718 = vmatpush1.msra.mxu0 0.0
  %1719 = vmatprep.subr.mxu0 0.0
  %1720 = vmatpush1.msra.mxu0 0.0
  %1721 = vmatprep.subr.mxu0 0.0
  %1722 = vmatpush1.msra.mxu0 0.0
  %1723 = vmatprep.subr.mxu0 0.0
  %1724 = vmatpush1.msra.mxu0 0.0
  %1725 = vmatprep.subr.mxu0 0.0
  %1726 = vmatpush1.msra.mxu0 0.0
  %1727 = vmatprep.subr.mxu0 0.0
  %1728 = vmatpush1.msra.mxu0 0.0
  %1729 = vmatprep.subr.mxu0 0.0
  %1730 = vmatpush1.msra.mxu0 0.0
  %1731 = vmatprep.subr.mxu0 0.0
  %1732 = vmatpush1.msra.mxu0 0.0
  %1733 = vmatprep.subr.mxu0 0.0
  %1734 = vmatpush1.msra.mxu0 0.0
  %1735 = vmatprep.subr.mxu0 0.0
  %1736 = vmatpush1.msra.mxu0 0.0
  %1737 = vmatprep.mubr.f32.mxu0 0.0
  %v1738 = vand.u32 %v1288, 4294901760
  %v1739 = vsub.f32 %v1288, %v1738
  %v1740 = vand.u32 %v1739, 4294901760
  %1741 = vmatmul.mubr.f32.gmra.mrb[0].mxu0 %v1740
  %v1742 = vpop.f32.mrb[0].mxu0
  %v1743 = vadd.f32 %v1651, %v1742
  %v1744 = vpop.f32.mrb[0].mxu0
  %v1745 = vadd.f32 %v1653, %v1744
  %1746 = vdwg.mxu0
  %v1747 = vand.u32 %v1263, 4294901760
  %v1748 = vsub.f32 %v1263, %v1747
  %v1749 = vand.u32 %v1748, 4294901760
  %1750 = vmatprep.subr.mxu0 %v1749
  %v1751 = vand.u32 %v1262, 4294901760
  %v1752 = vsub.f32 %v1262, %v1751
  %v1753 = vand.u32 %v1752, 4294901760
  %1754 = vmatpush1.msra.mxu0 %v1753
  %v1755 = vand.u32 %v1265, 4294901760
  %v1756 = vsub.f32 %v1265, %v1755
  %v1757 = vand.u32 %v1756, 4294901760
  %1758 = vmatprep.subr.mxu0 %v1757
  %v1759 = vand.u32 %v1264, 4294901760
  %v1760 = vsub.f32 %v1264, %v1759
  %v1761 = vand.u32 %v1760, 4294901760
  %1762 = vmatpush1.msra.mxu0 %v1761
  %v1763 = vand.u32 %v1267, 4294901760
  %v1764 = vsub.f32 %v1267, %v1763
  %v1765 = vand.u32 %v1764, 4294901760
  %1766 = vmatprep.subr.mxu0 %v1765
  %v1767 = vand.u32 %v1266, 4294901760
  %v1768 = vsub.f32 %v1266, %v1767
  %v1769 = vand.u32 %v1768, 4294901760
  %1770 = vmatpush1.msra.mxu0 %v1769
  %v1771 = vand.u32 %v1269, 4294901760
  %v1772 = vsub.f32 %v1269, %v1771
  %v1773 = vand.u32 %v1772, 4294901760
  %1774 = vmatprep.subr.mxu0 %v1773
  %v1775 = vand.u32 %v1268, 4294901760
  %v1776 = vsub.f32 %v1268, %v1775
  %v1777 = vand.u32 %v1776, 4294901760
  %1778 = vmatpush1.msra.mxu0 %v1777
  %v1779 = vand.u32 %v1271, 4294901760
  %v1780 = vsub.f32 %v1271, %v1779
  %v1781 = vand.u32 %v1780, 4294901760
  %1782 = vmatprep.subr.mxu0 %v1781
  %v1783 = vand.u32 %v1270, 4294901760
  %v1784 = vsub.f32 %v1270, %v1783
  %v1785 = vand.u32 %v1784, 4294901760
  %1786 = vmatpush1.msra.mxu0 %v1785
  %v1787 = vand.u32 %v1273, 4294901760
  %v1788 = vsub.f32 %v1273, %v1787
  %v1789 = vand.u32 %v1788, 4294901760
  %1790 = vmatprep.subr.mxu0 %v1789
  %v1791 = vand.u32 %v1272, 4294901760
  %v1792 = vsub.f32 %v1272, %v1791
  %v1793 = vand.u32 %v1792, 4294901760
  %1794 = vmatpush1.msra.mxu0 %v1793
  %v1795 = vand.u32 %v1275, 4294901760
  %v1796 = vsub.f32 %v1275, %v1795
  %v1797 = vand.u32 %v1796, 4294901760
  %1798 = vmatprep.subr.mxu0 %v1797
  %v1799 = vand.u32 %v1274, 4294901760
  %v1800 = vsub.f32 %v1274, %v1799
  %v1801 = vand.u32 %v1800, 4294901760
  %1802 = vmatpush1.msra.mxu0 %v1801
  %v1803 = vand.u32 %v1277, 4294901760
  %v1804 = vsub.f32 %v1277, %v1803
  %v1805 = vand.u32 %v1804, 4294901760
  %1806 = vmatprep.subr.mxu0 %v1805
  %v1807 = vand.u32 %v1276, 4294901760
  %v1808 = vsub.f32 %v1276, %v1807
  %v1809 = vand.u32 %v1808, 4294901760
  %1810 = vmatpush1.msra.mxu0 %v1809
  %v1811 = vand.u32 %v1279, 4294901760
  %v1812 = vsub.f32 %v1279, %v1811
  %v1813 = vand.u32 %v1812, 4294901760
  %1814 = vmatprep.subr.mxu0 %v1813
  %v1815 = vand.u32 %v1278, 4294901760
  %v1816 = vsub.f32 %v1278, %v1815
  %v1817 = vand.u32 %v1816, 4294901760
  %1818 = vmatpush1.msra.mxu0 %v1817
  %1819 = vmatprep.subr.mxu0 0.0
  %1820 = vmatpush1.msra.mxu0 0.0
  %1821 = vmatprep.subr.mxu0 0.0
  %1822 = vmatpush1.msra.mxu0 0.0
  %1823 = vmatprep.subr.mxu0 0.0
  %1824 = vmatpush1.msra.mxu0 0.0
  %1825 = vmatprep.subr.mxu0 0.0
  %1826 = vmatpush1.msra.mxu0 0.0
  %1827 = vmatprep.subr.mxu0 0.0
  %1828 = vmatpush1.msra.mxu0 0.0
  %1829 = vmatprep.subr.mxu0 0.0
  %1830 = vmatpush1.msra.mxu0 0.0
  %1831 = vmatprep.subr.mxu0 0.0
  %1832 = vmatpush1.msra.mxu0 0.0
  %1833 = vmatprep.subr.mxu0 0.0
  %1834 = vmatpush1.msra.mxu0 0.0
  %1835 = vmatprep.subr.mxu0 0.0
  %1836 = vmatpush1.msra.mxu0 0.0
  %1837 = vmatprep.subr.mxu0 0.0
  %1838 = vmatpush1.msra.mxu0 0.0
  %1839 = vmatprep.subr.mxu0 0.0
  %1840 = vmatpush1.msra.mxu0 0.0
  %1841 = vmatprep.subr.mxu0 0.0
  %1842 = vmatpush1.msra.mxu0 0.0
  %1843 = vmatprep.subr.mxu0 0.0
  %1844 = vmatpush1.msra.mxu0 0.0
  %1845 = vmatprep.subr.mxu0 0.0
  %1846 = vmatpush1.msra.mxu0 0.0
  %1847 = vmatprep.subr.mxu0 0.0
  %1848 = vmatpush1.msra.mxu0 0.0
  %1849 = vmatprep.subr.mxu0 0.0
  %1850 = vmatpush1.msra.mxu0 0.0
  %1851 = vmatprep.subr.mxu0 0.0
  %1852 = vmatpush1.msra.mxu0 0.0
  %1853 = vmatprep.subr.mxu0 0.0
  %1854 = vmatpush1.msra.mxu0 0.0
  %1855 = vmatprep.subr.mxu0 0.0
  %1856 = vmatpush1.msra.mxu0 0.0
  %1857 = vmatprep.subr.mxu0 0.0
  %1858 = vmatpush1.msra.mxu0 0.0
  %1859 = vmatprep.subr.mxu0 0.0
  %1860 = vmatpush1.msra.mxu0 0.0
  %1861 = vmatprep.subr.mxu0 0.0
  %1862 = vmatpush1.msra.mxu0 0.0
  %1863 = vmatprep.subr.mxu0 0.0
  %1864 = vmatpush1.msra.mxu0 0.0
  %1865 = vmatprep.mubr.f32.mxu0 0.0
  %v1866 = vand.u32 %v1288, 4294901760
  %1867 = vmatmul.mubr.f32.gmra.mrb[0].mxu0 %v1866
  %v1868 = vpop.f32.mrb[0].mxu0
  %v1869 = vadd.f32 %v1743, %v1868
  %v1870 = vpop.f32.mrb[0].mxu0
  %v1871 = vadd.f32 %v1745, %v1870
  %1872 = vdwg.mxu0
  %v1873 = vand.u32 %v1263, 4294901760
  %1874 = vmatprep.subr.mxu0 %v1873
  %v1875 = vand.u32 %v1262, 4294901760
  %1876 = vmatpush1.msra.mxu0 %v1875
  %v1877 = vand.u32 %v1265, 4294901760
  %1878 = vmatprep.subr.mxu0 %v1877
  %v1879 = vand.u32 %v1264, 4294901760
  %1880 = vmatpush1.msra.mxu0 %v1879
  %v1881 = vand.u32 %v1267, 4294901760
  %1882 = vmatprep.subr.mxu0 %v1881
  %v1883 = vand.u32 %v1266, 4294901760
  %1884 = vmatpush1.msra.mxu0 %v1883
  %v1885 = vand.u32 %v1269, 4294901760
  %1886 = vmatprep.subr.mxu0 %v1885
  %v1887 = vand.u32 %v1268, 4294901760
  %1888 = vmatpush1.msra.mxu0 %v1887
  %v1889 = vand.u32 %v1271, 4294901760
  %1890 = vmatprep.subr.mxu0 %v1889
  %v1891 = vand.u32 %v1270, 4294901760
  %1892 = vmatpush1.msra.mxu0 %v1891
  %v1893 = vand.u32 %v1273, 4294901760
  %1894 = vmatprep.subr.mxu0 %v1893
  %v1895 = vand.u32 %v1272, 4294901760
  %1896 = vmatpush1.msra.mxu0 %v1895
  %v1897 = vand.u32 %v1275, 4294901760
  %1898 = vmatprep.subr.mxu0 %v1897
  %v1899 = vand.u32 %v1274, 4294901760
  %1900 = vmatpush1.msra.mxu0 %v1899
  %v1901 = vand.u32 %v1277, 4294901760
  %1902 = vmatprep.subr.mxu0 %v1901
  %v1903 = vand.u32 %v1276, 4294901760
  %1904 = vmatpush1.msra.mxu0 %v1903
  %v1905 = vand.u32 %v1279, 4294901760
  %1906 = vmatprep.subr.mxu0 %v1905
  %v1907 = vand.u32 %v1278, 4294901760
  %1908 = vmatpush1.msra.mxu0 %v1907
  %1909 = vmatprep.subr.mxu0 0.0
  %1910 = vmatpush1.msra.mxu0 0.0
  %1911 = vmatprep.subr.mxu0 0.0
  %1912 = vmatpush1.msra.mxu0 0.0
  %1913 = vmatprep.subr.mxu0 0.0
  %1914 = vmatpush1.msra.mxu0 0.0
  %1915 = vmatprep.subr.mxu0 0.0
  %1916 = vmatpush1.msra.mxu0 0.0
  %1917 = vmatprep.subr.mxu0 0.0
  %1918 = vmatpush1.msra.mxu0 0.0
  %1919 = vmatprep.subr.mxu0 0.0
  %1920 = vmatpush1.msra.mxu0 0.0
  %1921 = vmatprep.subr.mxu0 0.0
  %1922 = vmatpush1.msra.mxu0 0.0
  %1923 = vmatprep.subr.mxu0 0.0
  %1924 = vmatpush1.msra.mxu0 0.0
  %1925 = vmatprep.subr.mxu0 0.0
  %1926 = vmatpush1.msra.mxu0 0.0
  %1927 = vmatprep.subr.mxu0 0.0
  %1928 = vmatpush1.msra.mxu0 0.0
  %1929 = vmatprep.subr.mxu0 0.0
  %1930 = vmatpush1.msra.mxu0 0.0
  %1931 = vmatprep.subr.mxu0 0.0
  %1932 = vmatpush1.msra.mxu0 0.0
  %1933 = vmatprep.subr.mxu0 0.0
  %1934 = vmatpush1.msra.mxu0 0.0
  %1935 = vmatprep.subr.mxu0 0.0
  %1936 = vmatpush1.msra.mxu0 0.0
  %1937 = vmatprep.subr.mxu0 0.0
  %1938 = vmatpush1.msra.mxu0 0.0
  %1939 = vmatprep.subr.mxu0 0.0
  %1940 = vmatpush1.msra.mxu0 0.0
  %1941 = vmatprep.subr.mxu0 0.0
  %1942 = vmatpush1.msra.mxu0 0.0
  %1943 = vmatprep.subr.mxu0 0.0
  %1944 = vmatpush1.msra.mxu0 0.0
  %1945 = vmatprep.subr.mxu0 0.0
  %1946 = vmatpush1.msra.mxu0 0.0
  %1947 = vmatprep.subr.mxu0 0.0
  %1948 = vmatpush1.msra.mxu0 0.0
  %1949 = vmatprep.subr.mxu0 0.0
  %1950 = vmatpush1.msra.mxu0 0.0
  %1951 = vmatprep.subr.mxu0 0.0
  %1952 = vmatpush1.msra.mxu0 0.0
  %1953 = vmatprep.subr.mxu0 0.0
  %1954 = vmatpush1.msra.mxu0 0.0
  %1955 = vmatprep.mubr.f32.mxu0 0.0
  %v1956 = vand.u32 %v1288, 4294901760
  %1957 = vmatmul.mubr.f32.gmra.mrb[0].mxu0 %v1956
  %v1958 = vpop.f32.mrb[0].mxu0
  %v1959 = vadd.f32 %v1869, %v1958
  %v1960 = vpop.f32.mrb[0].mxu0
  %v1961 = vadd.f32 %v1871, %v1960
  %1962 = vdwg.mxu0
  %v1963 = vmax.f32 %v1959, 0.0
  %v1964 = vmax.f32 %v1961, 0.0
  %v1965 = vmul.f32 %v1963, 0.99999
  %v1966 = vmul.f32 %v1964, 0.99999
  %1967 = vst [vmem:[%s6] sm:$0xff] %v1965
  %1968 = vst [vmem:[%s6 + $0x8] sm:$0xff] %v1966
  // Predicated region
  $region26: #{downg_forward.1} parent=0 // pred_check
    _
  $region27: #{downg_forward.1} parent=0 // pred_check_branch
    %1970 = sbr.rel (0) target = $region29
  $region28: #{downg_forward.1} parent=0 // pred_region
    _
  $region29: #{downg_forward.1} parent=0 // pred_fallthru
    _
  // Predicated region
  $region30: #{downg_forward.1} parent=0 // pred_check
    _
  $region31: #{downg_forward.1} parent=0 // pred_check_branch
    %1972 = sbr.rel (0) target = $region33
  $region32: #{downg_forward.1} parent=0 // pred_region
    _
  $region33: #{downg_forward.1} parent=0 // pred_fallthru
    _

</llo_original>
